<compile_context>
chip_gen: v6e
topology: v6e:2x2x1
jax: 0.10.0
libtpu: 0.0.40
codegen_flags: <defaults>
</compile_context>

<pallas_src>
import math
import jax
import jax.numpy as jnp
from jax.experimental import pallas as pl
from jax.experimental.pallas import tpu as pltpu

EPS = 1e-6
ATANH_CLIP = 1.0 - 1e-5
TANH_CLIP = 15.0
LANE = 128      # lane tile (last dim)
SUBLANE = 8     # sublane tile (second-to-last dim)


# ----------------------- manifold helpers (in-kernel) -------------------------
def _sqnorm(x):
    return jnp.sum(x * x, axis=-1, keepdims=True)              # [B, 1]


def _artanh(t):                                                 # t is [B, 1]
    t = jnp.clip(t, 0.0, ATANH_CLIP)
    return 0.5 * jnp.log((1.0 + t) / (1.0 - t))


def _zero_log(x, x2=None):
    if x2 is None:
        x2 = _sqnorm(x)
    n = jnp.sqrt(x2 + EPS)
    return x * (_artanh(n) / n)                                 # divide on [B,1]


def _zero_exp_n(v, v2=None):
    if v2 is None:
        v2 = _sqnorm(v)
    n = jnp.sqrt(v2 + EPS)
    t = jnp.tanh(jnp.clip(n, 0.0, TANH_CLIP))
    return v * (t / n), t * t                                   # value, ||value||^2


def _mobius_add(x, y, x2=None, y2=None, exact=False):
    xy = jnp.sum(x * y, axis=-1, keepdims=True)
    if x2 is None:
        x2 = _sqnorm(x)
    if y2 is None:
        y2 = _sqnorm(y)
    num = (1.0 + 2.0 * xy + y2) * x + (1.0 - x2) * y
    den = 1.0 + 2.0 * xy + x2 * y2                              # [B, 1]
    if exact:
        return num / (den + EPS)                                # exact divide (final add)
    return num * pl.reciprocal(den + EPS, approx=True)          # EUP slot, ~free


# --------------------------------- kernel ------------------------------------
def gru_cell_kernel(x_ref, hx_ref, wx_ref, wh_ref, w_ref,
                    br_ref, bz_ref, bu_ref, out_ref):
    F = out_ref.shape[-1]                                        # padded out_features

    # --- hoisted log maps; matmul operands cast to bf16 (f32 MXU accumulation) ---
    x = x_ref[...]
    log_x = _zero_log(x)
    ux = jnp.dot(log_x.astype(wx_ref.dtype), wx_ref[...],
                 preferred_element_type=jnp.float32)             # [B, 3F]

    hx = hx_ref[...]
    hx2 = _sqnorm(hx)
    log_hx = _zero_log(hx, hx2)
    uh = jnp.dot(log_hx.astype(wh_ref.dtype), wh_ref[...],
                 preferred_element_type=jnp.float32)             # [B, 2F]

    # --- r gate chain, computed fully first so its temporaries die early ---------
    b_r = br_ref[...]
    m_rx, m_rx2 = _zero_exp_n(ux[:, :F])                         # exp_0(log_x @ u_r_w^T)
    u_r = _mobius_add(m_rx, b_r, x2=m_rx2, y2=_sqnorm(b_r))
    m_rh, m_rh2 = _zero_exp_n(uh[:, :F])                         # exp_0(log_hx @ w_r^T)
    r = jax.nn.sigmoid(_zero_log(_mobius_add(m_rh, u_r, x2=m_rh2)))

    # --- candidate state: bmm(W*r, log_0(hx)) == (r*log_0(hx)) @ W^T (w_ref = W^T)
    wh_v = jnp.dot((r * log_hx).astype(w_ref.dtype), w_ref[...],
                   preferred_element_type=jnp.float32)
    exp_wh, exp_wh2 = _zero_exp_n(wh_v)
    b_u = bu_ref[...]
    m_ux, m_ux2 = _zero_exp_n(ux[:, 2 * F:])                     # exp_0(log_x @ u_w^T)
    u_x = _mobius_add(m_ux, b_u, x2=m_ux2, y2=_sqnorm(b_u))
    pre = _mobius_add(exp_wh, u_x, x2=exp_wh2)
    inter, inter2 = _zero_exp_n(jnp.tanh(_zero_log(pre)))

    # --- z gate, kept late so it is live only until the update below -------------
    b_z = bz_ref[...]
    m_zx, m_zx2 = _zero_exp_n(ux[:, F:2 * F])                    # exp_0(log_x @ u_z_w^T)
    u_z = _mobius_add(m_zx, b_z, x2=m_zx2, y2=_sqnorm(b_z))
    m_zh, m_zh2 = _zero_exp_n(uh[:, F:])                         # exp_0(log_hx @ w_z^T)
    z = jax.nn.sigmoid(_zero_log(_mobius_add(m_zh, u_z, x2=m_zh2)))

    # --- out = hx (+) exp_0( z * log_0( (-hx) (+) intermediate ) ) ---------------
    delta = _zero_log(_mobius_add(-hx, inter, x2=hx2, y2=inter2))
    upd, upd2 = _zero_exp_n(z * delta)
    out_ref[...] = _mobius_add(hx, upd, x2=hx2, y2=upd2, exact=True)


# -------------------------------- wrapper -------------------------------------
def _round_up(n, m):
    return ((n + m - 1) // m) * m


def _zero_exp_host(v):
    # Same formula as the in-kernel exp map; runs once per parameter prep in plain JAX.
    n = jnp.sqrt(jnp.sum(v * v, axis=-1, keepdims=True) + EPS)
    return v * (jnp.tanh(jnp.clip(n, 0.0, TANH_CLIP)) / n)


def _vmem_limit_bytes(tile_b, fin_p, fout_p, weight_bytes):
    try:
        cap = int(pltpu.get_tpu_info().vmem_capacity_bytes)
    except Exception:                                   # fallback: smallest per-TC VMEM (v7x)
        cap = 64 << 20
    cap = (cap * 3) // 4                                # ~75%: leave headroom for spill scratch
    io = 2 * 4 * tile_b * (fin_p + 2 * fout_p)          # double-buffered x/hx/out tiles
    tmp = 4 * tile_b * (30 * fout_p + fin_p)            # ~25-30 live [tile_b,F] f32 temporaries
    need = 2 * weight_bytes + io + tmp + (4 << 20)      # 2x weights = safe even without Buffered(1)
    return int(min(max(need, 32 << 20), cap))


def _resident_spec(shape):
    """Same block every grid step -> stays in VMEM across the whole grid.
    Single-buffered where supported (halves resident-weight VMEM; matters most on
    v7x's 64 MiB per-core VMEM)."""
    idx = lambda i: (0, 0)
    try:
        return pl.BlockSpec(shape, idx, pipeline_mode=pl.Buffered(1))
    except (TypeError, AttributeError):
        return pl.BlockSpec(shape, idx)


def prepare_params(params, *, compute_dtype=jnp.bfloat16):
    """One-time host-side prep (call OUTSIDE any RNN time loop): fuse + pre-transpose
    + zero-pad weights to lane multiples, cast to bf16 for the MXU, and precompute
    exp_0(bias).  Zero pad rows/cols/lanes keep all norms exact."""
    Fout, Fin = params["u_r_w"].shape
    fin_p = _round_up(Fin, LANE)
    fout_p = _round_up(Fout, LANE)

    def padw(w, rows):                                   # [out, in] -> padded [rows, fout_p]
        w_t = w.T.astype(jnp.float32)
        return jnp.pad(w_t, ((0, rows - w_t.shape[0]), (0, fout_p - w_t.shape[1])))

    wx = jnp.concatenate([padw(params["u_r_w"], fin_p),
                          padw(params["u_z_w"], fin_p),
                          padw(params["u_w"], fin_p)], axis=1).astype(compute_dtype)
    wh = jnp.concatenate([padw(params["w_r"], fout_p),
                          padw(params["w_z"], fout_p)], axis=1).astype(compute_dtype)
    wt = padw(params["w"], fout_p).astype(compute_dtype)

    def padb(b):                                         # exp_0(bias), padded lanes stay 0
        eb = _zero_exp_host(b.astype(jnp.float32))
        return jnp.pad(eb, ((0, 0), (0, fout_p - eb.shape[1])))

    return {"wx": wx, "wh": wh, "wt": wt,
            "b_r": padb(params["u_r_b"]),
            "b_z": padb(params["u_z_b"]),
            "b_u": padb(params["u_b"])}


def gru_cell(x, hx, params, *, tile_b=256):
    """x: [B, in_features], hx: [B, out_features].
    `params` is either the raw dict from init_params() or prepare_params() output
    (preferred: prepare once outside the time loop)."""
    if "wx" not in params:
        params = prepare_params(params)
    wx, wh, wt = params["wx"], params["wh"], params["wt"]
    b_r, b_z, b_u = params["b_r"], params["b_z"], params["b_u"]

    B, Fin = x.shape
    _, Fout = hx.shape
    fin_p, wx_cols = wx.shape
    fout_p = wt.shape[0]
    assert wx_cols == 3 * fout_p and Fin <= fin_p and Fout <= fout_p

    # --- batch tiling: sublane-aligned tile; guarantee >=2 grid steps when possible
    #     so dimension_semantics=("parallel",) can shard across both v7x TensorCores.
    b8 = _round_up(B, SUBLANE)
    tile_b = max(SUBLANE, min(tile_b, b8))
    if b8 // tile_b < 2 and b8 >= 2 * SUBLANE:
        tile_b = _round_up((b8 + 1) // 2, SUBLANE)
    b_pad = _round_up(B, tile_b)

    # --- zero-pad activations (zero rows/lanes are norm-safe and sliced off below) ---
    x = jnp.pad(x.astype(jnp.float32), ((0, b_pad - B), (0, fin_p - Fin)))
    hx = jnp.pad(hx.astype(jnp.float32), ((0, b_pad - B), (0, fout_p - Fout)))

    grid = (b_pad // tile_b,)

    def batch_spec(f):
        return pl.BlockSpec((tile_b, f), lambda i: (i, 0))

    weight_bytes = (wx.size * wx.dtype.itemsize + wh.size * wh.dtype.itemsize
                    + wt.size * wt.dtype.itemsize + 3 * 4 * fout_p)
    cost = pl.CostEstimate(
        flops=2 * b_pad * (fin_p * 3 * fout_p + 3 * fout_p * fout_p),
        transcendentals=3 * b_pad * fout_p + 16 * b_pad,
        bytes_accessed=4 * b_pad * (fin_p + 2 * fout_p) + weight_bytes,
    )

    # TODO(synk): for very large Fin/Fout (~2k+) on v7x, stream wx/wh/wt through VMEM
    # via an extra "arbitrary" grid axis instead of keeping them fully resident.
    out = pl.pallas_call(
        gru_cell_kernel,
        out_shape=jax.ShapeDtypeStruct((b_pad, fout_p), jnp.float32),
        grid=grid,
        in_specs=[
            batch_spec(fin_p),                     # x
            batch_spec(fout_p),                    # hx
            _resident_spec((fin_p, 3 * fout_p)),   # fused x-side weights (pre-transposed, bf16)
            _resident_spec((fout_p, 2 * fout_p)),  # fused hx-side weights (pre-transposed, bf16)
            _resident_spec((fout_p, fout_p)),      # W^T (bf16)
            _resident_spec((1, fout_p)),           # exp_0(u_r_b)
            _resident_spec((1, fout_p)),           # exp_0(u_z_b)
            _resident_spec((1, fout_p)),           # exp_0(u_b)
        ],
        out_specs=batch_spec(fout_p),
        compiler_params=pltpu.CompilerParams(
            dimension_semantics=("parallel",),
            vmem_limit_bytes=_vmem_limit_bytes(tile_b, fin_p, fout_p, weight_bytes),
        ),
        cost_estimate=cost,
    )(x, hx, wx, wh, wt, b_r, b_z, b_u)
    return out[:B, :Fout]


def init_params(key, in_features, out_features):
    ks = jax.random.split(key, 9)

    def ku(k, shape, fan_in):
        # kaiming_uniform_(a=sqrt(5)) == U(-1/sqrt(fan_in), 1/sqrt(fan_in))
        bound = 1.0 / math.sqrt(fan_in)
        return jax.random.uniform(k, shape, jnp.float32, -bound, bound)

    return {
        "w_r":   ku(ks[0], (out_features, out_features), out_features),
        "u_r_w": ku(ks[1], (out_features, in_features), in_features),
        "u_r_b": ku(ks[2], (1, out_features), in_features),
        "w_z":   ku(ks[3], (out_features, out_features), out_features),
        "u_z_w": ku(ks[4], (out_features, in_features), in_features),
        "u_z_b": ku(ks[5], (1, out_features), in_features),
        "u_w":   ku(ks[6], (out_features, in_features), in_features),
        "u_b":   ku(ks[7], (1, out_features), in_features),
        "w":     ku(ks[8], (out_features, out_features), out_features),
    }


if __name__ == "__main__":
    B, IN_F, OUT_F = 8, 32, 32
    key = jax.random.PRNGKey(0)
    kx, kh, kp = jax.random.split(key, 3)

    # points well inside the unit (Poincare) ball
    x = 0.05 * jax.random.normal(kx, (B, IN_F), jnp.float32)
    hx = 0.05 * jax.random.normal(kh, (B, OUT_F), jnp.float32)
    params = init_params(kp, IN_F, OUT_F)

    prepared = prepare_params(params)          # one-time prep, hoisted out of any time loop
    out = jax.jit(gru_cell)(x, hx, prepared)
    out = jax.block_until_ready(out)

    assert out.shape == (B, OUT_F)
    assert bool(jnp.all(jnp.isfinite(out)))
    print("KERNEL_OK")
</pallas_src>

<mosaic_0001>
module attributes {stable_mosaic.version = 11 : i64} {
  func.func @gru_cell_kernel(%arg0: i32, %arg1: memref<8x128xf32, #tpu.memory_space<vmem>>, %arg2: memref<8x128xf32, #tpu.memory_space<vmem>>, %arg3: memref<128x384xbf16, #tpu.memory_space<vmem>>, %arg4: memref<128x256xbf16, #tpu.memory_space<vmem>>, %arg5: memref<128x128xbf16, #tpu.memory_space<vmem>>, %arg6: memref<1x128xf32, #tpu.memory_space<vmem>>, %arg7: memref<1x128xf32, #tpu.memory_space<vmem>>, %arg8: memref<1x128xf32, #tpu.memory_space<vmem>>, %arg9: memref<8x128xf32, #tpu.memory_space<vmem>>) attributes {dimension_semantics = [#tpu.dimension_semantics<parallel>], iteration_bounds = array<i64: 1>, scalar_prefetch = 0 : i64, scratch_operands = 0 : i64, tpu.core_type = #tpu.core_type<tc>, window_params = [{transform_indices = @transform_0, window_bounds = array<i64: 8, 128>}, {transform_indices = @transform_1, window_bounds = array<i64: 8, 128>}, {pipeline_mode = #tpu.pipeline_mode<synchronous>, transform_indices = @transform_2, window_bounds = array<i64: 128, 384>}, {pipeline_mode = #tpu.pipeline_mode<synchronous>, transform_indices = @transform_3, window_bounds = array<i64: 128, 256>}, {pipeline_mode = #tpu.pipeline_mode<synchronous>, transform_indices = @transform_4, window_bounds = array<i64: 128, 128>}, {pipeline_mode = #tpu.pipeline_mode<synchronous>, transform_indices = @transform_5, window_bounds = array<i64: 1, 128>}, {pipeline_mode = #tpu.pipeline_mode<synchronous>, transform_indices = @transform_6, window_bounds = array<i64: 1, 128>}, {pipeline_mode = #tpu.pipeline_mode<synchronous>, transform_indices = @transform_7, window_bounds = array<i64: 1, 128>}, {transform_indices = @transform_8, window_bounds = array<i64: 8, 128>}]} {
    %c0 = arith.constant 0 : index
    %c0_0 = arith.constant 0 : index
    %0 = vector.load %arg1[%c0, %c0_0] : memref<8x128xf32, #tpu.memory_space<vmem>>, vector<8x128xf32>
    %1 = arith.mulf %0, %0 : vector<8x128xf32>
    %cst = arith.constant dense<0.000000e+00> : vector<8xf32>
    %2 = vector.multi_reduction <add>, %1, %cst [1] : vector<8x128xf32> to vector<8xf32>
    %3 = vector.shape_cast %2 : vector<8xf32> to vector<8x1xf32>
    %cst_1 = arith.constant 9.99999997E-7 : f32
    %4 = vector.broadcast %cst_1 : f32 to vector<8x1xf32>
    %5 = arith.addf %3, %4 : vector<8x1xf32>
    %6 = math.sqrt %5 : vector<8x1xf32>
    %cst_2 = arith.constant 0.000000e+00 : f32
    %cst_3 = arith.constant 0.999989986 : f32
    %7 = vector.broadcast %cst_2 : f32 to vector<8x1xf32>
    %8 = arith.maximumf %7, %6 : vector<8x1xf32>
    %9 = vector.broadcast %cst_3 : f32 to vector<8x1xf32>
    %10 = arith.minimumf %9, %8 : vector<8x1xf32>
    %cst_4 = arith.constant 1.000000e+00 : f32
    %11 = vector.broadcast %cst_4 : f32 to vector<8x1xf32>
    %12 = arith.addf %11, %10 : vector<8x1xf32>
    %cst_5 = arith.constant 1.000000e+00 : f32
    %13 = vector.broadcast %cst_5 : f32 to vector<8x1xf32>
    %14 = arith.subf %13, %10 : vector<8x1xf32>
    %15 = arith.divf %12, %14 : vector<8x1xf32>
    %16 = math.log %15 : vector<8x1xf32>
    %cst_6 = arith.constant 5.000000e-01 : f32
    %17 = vector.broadcast %cst_6 : f32 to vector<8x1xf32>
    %18 = arith.mulf %17, %16 : vector<8x1xf32>
    %19 = arith.divf %18, %6 : vector<8x1xf32>
    %20 = vector.broadcast %19 : vector<8x1xf32> to vector<8x128xf32>
    %21 = arith.mulf %0, %20 : vector<8x128xf32>
    %22 = arith.truncf %21 : vector<8x128xf32> to vector<8x128xbf16>
    %c0_7 = arith.constant 0 : index
    %c0_8 = arith.constant 0 : index
    %23 = vector.load %arg3[%c0_7, %c0_8] : memref<128x384xbf16, #tpu.memory_space<vmem>>, vector<128x384xbf16>
    %cst_9 = arith.constant dense<0.000000e+00> : vector<8x384xf32>
    %24 = tpu.matmul %22, %23, %cst_9 {dimension_numbers = #tpu.dot_dimension_numbers<[1], [0], [0], [1], [0, 0, 1, 1], [], []>} : vector<8x128xbf16>, vector<128x384xbf16>, vector<8x384xf32> -> vector<8x384xf32>
    %c0_10 = arith.constant 0 : index
    %c0_11 = arith.constant 0 : index
    %25 = vector.load %arg2[%c0_10, %c0_11] : memref<8x128xf32, #tpu.memory_space<vmem>>, vector<8x128xf32>
    %26 = arith.mulf %25, %25 : vector<8x128xf32>
    %cst_12 = arith.constant dense<0.000000e+00> : vector<8xf32>
    %27 = vector.multi_reduction <add>, %26, %cst_12 [1] : vector<8x128xf32> to vector<8xf32>
    %28 = vector.shape_cast %27 : vector<8xf32> to vector<8x1xf32>
    %cst_13 = arith.constant 9.99999997E-7 : f32
    %29 = vector.broadcast %cst_13 : f32 to vector<8x1xf32>
    %30 = arith.addf %28, %29 : vector<8x1xf32>
    %31 = math.sqrt %30 : vector<8x1xf32>
    %cst_14 = arith.constant 0.000000e+00 : f32
    %cst_15 = arith.constant 0.999989986 : f32
    %32 = vector.broadcast %cst_14 : f32 to vector<8x1xf32>
    %33 = arith.maximumf %32, %31 : vector<8x1xf32>
    %34 = vector.broadcast %cst_15 : f32 to vector<8x1xf32>
    %35 = arith.minimumf %34, %33 : vector<8x1xf32>
    %cst_16 = arith.constant 1.000000e+00 : f32
    %36 = vector.broadcast %cst_16 : f32 to vector<8x1xf32>
    %37 = arith.addf %36, %35 : vector<8x1xf32>
    %cst_17 = arith.constant 1.000000e+00 : f32
    %38 = vector.broadcast %cst_17 : f32 to vector<8x1xf32>
    %39 = arith.subf %38, %35 : vector<8x1xf32>
    %40 = arith.divf %37, %39 : vector<8x1xf32>
    %41 = math.log %40 : vector<8x1xf32>
    %cst_18 = arith.constant 5.000000e-01 : f32
    %42 = vector.broadcast %cst_18 : f32 to vector<8x1xf32>
    %43 = arith.mulf %42, %41 : vector<8x1xf32>
    %44 = arith.divf %43, %31 : vector<8x1xf32>
    %45 = vector.broadcast %44 : vector<8x1xf32> to vector<8x128xf32>
    %46 = arith.mulf %25, %45 : vector<8x128xf32>
    %47 = arith.truncf %46 : vector<8x128xf32> to vector<8x128xbf16>
    %c0_19 = arith.constant 0 : index
    %c0_20 = arith.constant 0 : index
    %48 = vector.load %arg4[%c0_19, %c0_20] : memref<128x256xbf16, #tpu.memory_space<vmem>>, vector<128x256xbf16>
    %cst_21 = arith.constant dense<0.000000e+00> : vector<8x256xf32>
    %49 = tpu.matmul %47, %48, %cst_21 {dimension_numbers = #tpu.dot_dimension_numbers<[1], [0], [0], [1], [0, 0, 1, 1], [], []>} : vector<8x128xbf16>, vector<128x256xbf16>, vector<8x256xf32> -> vector<8x256xf32>
    %c0_22 = arith.constant 0 : index
    %c0_23 = arith.constant 0 : index
    %50 = vector.load %arg6[%c0_22, %c0_23] : memref<1x128xf32, #tpu.memory_space<vmem>>, vector<1x128xf32>
    %51 = vector.extract_strided_slice %24 {offsets = [0, 0], sizes = [8, 128], strides = [1, 1]} : vector<8x384xf32> to vector<8x128xf32>
    %52 = arith.mulf %51, %51 : vector<8x128xf32>
    %cst_24 = arith.constant dense<0.000000e+00> : vector<8xf32>
    %53 = vector.multi_reduction <add>, %52, %cst_24 [1] : vector<8x128xf32> to vector<8xf32>
    %54 = vector.shape_cast %53 : vector<8xf32> to vector<8x1xf32>
    %cst_25 = arith.constant 9.99999997E-7 : f32
    %55 = vector.broadcast %cst_25 : f32 to vector<8x1xf32>
    %56 = arith.addf %54, %55 : vector<8x1xf32>
    %57 = math.sqrt %56 : vector<8x1xf32>
    %cst_26 = arith.constant 0.000000e+00 : f32
    %cst_27 = arith.constant 1.500000e+01 : f32
    %58 = vector.broadcast %cst_26 : f32 to vector<8x1xf32>
    %59 = arith.maximumf %58, %57 : vector<8x1xf32>
    %60 = vector.broadcast %cst_27 : f32 to vector<8x1xf32>
    %61 = arith.minimumf %60, %59 : vector<8x1xf32>
    %62 = math.tanh %61 : vector<8x1xf32>
    %63 = arith.divf %62, %57 : vector<8x1xf32>
    %64 = vector.broadcast %63 : vector<8x1xf32> to vector<8x128xf32>
    %65 = arith.mulf %51, %64 : vector<8x128xf32>
    %66 = arith.mulf %62, %62 : vector<8x1xf32>
    %67 = arith.mulf %50, %50 : vector<1x128xf32>
    %cst_28 = arith.constant dense<0.000000e+00> : vector<1xf32>
    %68 = vector.multi_reduction <add>, %67, %cst_28 [1] : vector<1x128xf32> to vector<1xf32>
    %69 = vector.shape_cast %68 : vector<1xf32> to vector<1x1xf32>
    %70 = vector.broadcast %50 : vector<1x128xf32> to vector<8x128xf32>
    %71 = arith.mulf %65, %70 : vector<8x128xf32>
    %cst_29 = arith.constant dense<0.000000e+00> : vector<8xf32>
    %72 = vector.multi_reduction <add>, %71, %cst_29 [1] : vector<8x128xf32> to vector<8xf32>
    %73 = vector.shape_cast %72 : vector<8xf32> to vector<8x1xf32>
    %cst_30 = arith.constant 2.000000e+00 : f32
    %74 = vector.broadcast %cst_30 : f32 to vector<8x1xf32>
    %75 = arith.mulf %74, %73 : vector<8x1xf32>
    %cst_31 = arith.constant 1.000000e+00 : f32
    %76 = vector.broadcast %cst_31 : f32 to vector<8x1xf32>
    %77 = arith.addf %76, %75 : vector<8x1xf32>
    %78 = vector.broadcast %69 : vector<1x1xf32> to vector<8x1xf32>
    %79 = arith.addf %77, %78 : vector<8x1xf32>
    %80 = vector.broadcast %79 : vector<8x1xf32> to vector<8x128xf32>
    %81 = arith.mulf %80, %65 : vector<8x128xf32>
    %cst_32 = arith.constant 1.000000e+00 : f32
    %82 = vector.broadcast %cst_32 : f32 to vector<8x1xf32>
    %83 = arith.subf %82, %66 : vector<8x1xf32>
    %84 = vector.broadcast %83 : vector<8x1xf32> to vector<8x128xf32>
    %85 = vector.broadcast %50 : vector<1x128xf32> to vector<8x128xf32>
    %86 = arith.mulf %84, %85 : vector<8x128xf32>
    %87 = arith.addf %81, %86 : vector<8x128xf32>
    %cst_33 = arith.constant 2.000000e+00 : f32
    %88 = vector.broadcast %cst_33 : f32 to vector<8x1xf32>
    %89 = arith.mulf %88, %73 : vector<8x1xf32>
    %cst_34 = arith.constant 1.000000e+00 : f32
    %90 = vector.broadcast %cst_34 : f32 to vector<8x1xf32>
    %91 = arith.addf %90, %89 : vector<8x1xf32>
    %92 = vector.broadcast %69 : vector<1x1xf32> to vector<8x1xf32>
    %93 = arith.mulf %66, %92 : vector<8x1xf32>
    %94 = arith.addf %91, %93 : vector<8x1xf32>
    %cst_35 = arith.constant 9.99999997E-7 : f32
    %95 = vector.broadcast %cst_35 : f32 to vector<8x1xf32>
    %96 = arith.addf %94, %95 : vector<8x1xf32>
    %97 = tpu.reciprocal %96 {approx = true} : vector<8x1xf32> -> vector<8x1xf32>
    %98 = vector.broadcast %97 : vector<8x1xf32> to vector<8x128xf32>
    %99 = arith.mulf %87, %98 : vector<8x128xf32>
    %100 = vector.extract_strided_slice %49 {offsets = [0, 0], sizes = [8, 128], strides = [1, 1]} : vector<8x256xf32> to vector<8x128xf32>
    %101 = arith.mulf %100, %100 : vector<8x128xf32>
    %cst_36 = arith.constant dense<0.000000e+00> : vector<8xf32>
    %102 = vector.multi_reduction <add>, %101, %cst_36 [1] : vector<8x128xf32> to vector<8xf32>
    %103 = vector.shape_cast %102 : vector<8xf32> to vector<8x1xf32>
    %cst_37 = arith.constant 9.99999997E-7 : f32
    %104 = vector.broadcast %cst_37 : f32 to vector<8x1xf32>
    %105 = arith.addf %103, %104 : vector<8x1xf32>
    %106 = math.sqrt %105 : vector<8x1xf32>
    %cst_38 = arith.constant 0.000000e+00 : f32
    %cst_39 = arith.constant 1.500000e+01 : f32
    %107 = vector.broadcast %cst_38 : f32 to vector<8x1xf32>
    %108 = arith.maximumf %107, %106 : vector<8x1xf32>
    %109 = vector.broadcast %cst_39 : f32 to vector<8x1xf32>
    %110 = arith.minimumf %109, %108 : vector<8x1xf32>
    %111 = math.tanh %110 : vector<8x1xf32>
    %112 = arith.divf %111, %106 : vector<8x1xf32>
    %113 = vector.broadcast %112 : vector<8x1xf32> to vector<8x128xf32>
    %114 = arith.mulf %100, %113 : vector<8x128xf32>
    %115 = arith.mulf %111, %111 : vector<8x1xf32>
    %116 = arith.mulf %114, %99 : vector<8x128xf32>
    %cst_40 = arith.constant dense<0.000000e+00> : vector<8xf32>
    %117 = vector.multi_reduction <add>, %116, %cst_40 [1] : vector<8x128xf32> to vector<8xf32>
    %118 = vector.shape_cast %117 : vector<8xf32> to vector<8x1xf32>
    %119 = arith.mulf %99, %99 : vector<8x128xf32>
    %cst_41 = arith.constant dense<0.000000e+00> : vector<8xf32>
    %120 = vector.multi_reduction <add>, %119, %cst_41 [1] : vector<8x128xf32> to vector<8xf32>
    %121 = vector.shape_cast %120 : vector<8xf32> to vector<8x1xf32>
    %cst_42 = arith.constant 2.000000e+00 : f32
    %122 = vector.broadcast %cst_42 : f32 to vector<8x1xf32>
    %123 = arith.mulf %122, %118 : vector<8x1xf32>
    %cst_43 = arith.constant 1.000000e+00 : f32
    %124 = vector.broadcast %cst_43 : f32 to vector<8x1xf32>
    %125 = arith.addf %124, %123 : vector<8x1xf32>
    %126 = arith.addf %125, %121 : vector<8x1xf32>
    %127 = vector.broadcast %126 : vector<8x1xf32> to vector<8x128xf32>
    %128 = arith.mulf %127, %114 : vector<8x128xf32>
    %cst_44 = arith.constant 1.000000e+00 : f32
    %129 = vector.broadcast %cst_44 : f32 to vector<8x1xf32>
    %130 = arith.subf %129, %115 : vector<8x1xf32>
    %131 = vector.broadcast %130 : vector<8x1xf32> to vector<8x128xf32>
    %132 = arith.mulf %131, %99 : vector<8x128xf32>
    %133 = arith.addf %128, %132 : vector<8x128xf32>
    %cst_45 = arith.constant 2.000000e+00 : f32
    %134 = vector.broadcast %cst_45 : f32 to vector<8x1xf32>
    %135 = arith.mulf %134, %118 : vector<8x1xf32>
    %cst_46 = arith.constant 1.000000e+00 : f32
    %136 = vector.broadcast %cst_46 : f32 to vector<8x1xf32>
    %137 = arith.addf %136, %135 : vector<8x1xf32>
    %138 = arith.mulf %115, %121 : vector<8x1xf32>
    %139 = arith.addf %137, %138 : vector<8x1xf32>
    %cst_47 = arith.constant 9.99999997E-7 : f32
    %140 = vector.broadcast %cst_47 : f32 to vector<8x1xf32>
    %141 = arith.addf %139, %140 : vector<8x1xf32>
    %142 = tpu.reciprocal %141 {approx = true} : vector<8x1xf32> -> vector<8x1xf32>
    %143 = vector.broadcast %142 : vector<8x1xf32> to vector<8x128xf32>
    %144 = arith.mulf %133, %143 : vector<8x128xf32>
    %145 = arith.mulf %144, %144 : vector<8x128xf32>
    %cst_48 = arith.constant dense<0.000000e+00> : vector<8xf32>
    %146 = vector.multi_reduction <add>, %145, %cst_48 [1] : vector<8x128xf32> to vector<8xf32>
    %147 = vector.shape_cast %146 : vector<8xf32> to vector<8x1xf32>
    %cst_49 = arith.constant 9.99999997E-7 : f32
    %148 = vector.broadcast %cst_49 : f32 to vector<8x1xf32>
    %149 = arith.addf %147, %148 : vector<8x1xf32>
    %150 = math.sqrt %149 : vector<8x1xf32>
    %cst_50 = arith.constant 0.000000e+00 : f32
    %cst_51 = arith.constant 0.999989986 : f32
    %151 = vector.broadcast %cst_50 : f32 to vector<8x1xf32>
    %152 = arith.maximumf %151, %150 : vector<8x1xf32>
    %153 = vector.broadcast %cst_51 : f32 to vector<8x1xf32>
    %154 = arith.minimumf %153, %152 : vector<8x1xf32>
    %cst_52 = arith.constant 1.000000e+00 : f32
    %155 = vector.broadcast %cst_52 : f32 to vector<8x1xf32>
    %156 = arith.addf %155, %154 : vector<8x1xf32>
    %cst_53 = arith.constant 1.000000e+00 : f32
    %157 = vector.broadcast %cst_53 : f32 to vector<8x1xf32>
    %158 = arith.subf %157, %154 : vector<8x1xf32>
    %159 = arith.divf %156, %158 : vector<8x1xf32>
    %160 = math.log %159 : vector<8x1xf32>
    %cst_54 = arith.constant 5.000000e-01 : f32
    %161 = vector.broadcast %cst_54 : f32 to vector<8x1xf32>
    %162 = arith.mulf %161, %160 : vector<8x1xf32>
    %163 = arith.divf %162, %150 : vector<8x1xf32>
    %164 = vector.broadcast %163 : vector<8x1xf32> to vector<8x128xf32>
    %165 = arith.mulf %144, %164 : vector<8x128xf32>
    %166 = arith.negf %165 : vector<8x128xf32>
    %167 = math.exp %166 : vector<8x128xf32>
    %cst_55 = arith.constant 1.000000e+00 : f32
    %168 = vector.broadcast %cst_55 : f32 to vector<8x128xf32>
    %169 = arith.addf %168, %167 : vector<8x128xf32>
    %170 = arith.divf %168, %169 : vector<8x128xf32>
    %171 = arith.mulf %170, %46 : vector<8x128xf32>
    %172 = arith.truncf %171 : vector<8x128xf32> to vector<8x128xbf16>
    %c0_56 = arith.constant 0 : index
    %c0_57 = arith.constant 0 : index
    %173 = vector.load %arg5[%c0_56, %c0_57] : memref<128x128xbf16, #tpu.memory_space<vmem>>, vector<128x128xbf16>
    %cst_58 = arith.constant dense<0.000000e+00> : vector<8x128xf32>
    %174 = tpu.matmul %172, %173, %cst_58 {dimension_numbers = #tpu.dot_dimension_numbers<[1], [0], [0], [1], [0, 0, 1, 1], [], []>} : vector<8x128xbf16>, vector<128x128xbf16>, vector<8x128xf32> -> vector<8x128xf32>
    %175 = arith.mulf %174, %174 : vector<8x128xf32>
    %cst_59 = arith.constant dense<0.000000e+00> : vector<8xf32>
    %176 = vector.multi_reduction <add>, %175, %cst_59 [1] : vector<8x128xf32> to vector<8xf32>
    %177 = vector.shape_cast %176 : vector<8xf32> to vector<8x1xf32>
    %cst_60 = arith.constant 9.99999997E-7 : f32
    %178 = vector.broadcast %cst_60 : f32 to vector<8x1xf32>
    %179 = arith.addf %177, %178 : vector<8x1xf32>
    %180 = math.sqrt %179 : vector<8x1xf32>
    %cst_61 = arith.constant 0.000000e+00 : f32
    %cst_62 = arith.constant 1.500000e+01 : f32
    %181 = vector.broadcast %cst_61 : f32 to vector<8x1xf32>
    %182 = arith.maximumf %181, %180 : vector<8x1xf32>
    %183 = vector.broadcast %cst_62 : f32 to vector<8x1xf32>
    %184 = arith.minimumf %183, %182 : vector<8x1xf32>
    %185 = math.tanh %184 : vector<8x1xf32>
    %186 = arith.divf %185, %180 : vector<8x1xf32>
    %187 = vector.broadcast %186 : vector<8x1xf32> to vector<8x128xf32>
    %188 = arith.mulf %174, %187 : vector<8x128xf32>
    %189 = arith.mulf %185, %185 : vector<8x1xf32>
    %c0_63 = arith.constant 0 : index
    %c0_64 = arith.constant 0 : index
    %190 = vector.load %arg8[%c0_63, %c0_64] : memref<1x128xf32, #tpu.memory_space<vmem>>, vector<1x128xf32>
    %191 = vector.extract_strided_slice %24 {offsets = [0, 256], sizes = [8, 128], strides = [1, 1]} : vector<8x384xf32> to vector<8x128xf32>
    %192 = arith.mulf %191, %191 : vector<8x128xf32>
    %cst_65 = arith.constant dense<0.000000e+00> : vector<8xf32>
    %193 = vector.multi_reduction <add>, %192, %cst_65 [1] : vector<8x128xf32> to vector<8xf32>
    %194 = vector.shape_cast %193 : vector<8xf32> to vector<8x1xf32>
    %cst_66 = arith.constant 9.99999997E-7 : f32
    %195 = vector.broadcast %cst_66 : f32 to vector<8x1xf32>
    %196 = arith.addf %194, %195 : vector<8x1xf32>
    %197 = math.sqrt %196 : vector<8x1xf32>
    %cst_67 = arith.constant 0.000000e+00 : f32
    %cst_68 = arith.constant 1.500000e+01 : f32
    %198 = vector.broadcast %cst_67 : f32 to vector<8x1xf32>
    %199 = arith.maximumf %198, %197 : vector<8x1xf32>
    %200 = vector.broadcast %cst_68 : f32 to vector<8x1xf32>
    %201 = arith.minimumf %200, %199 : vector<8x1xf32>
    %202 = math.tanh %201 : vector<8x1xf32>
    %203 = arith.divf %202, %197 : vector<8x1xf32>
    %204 = vector.broadcast %203 : vector<8x1xf32> to vector<8x128xf32>
    %205 = arith.mulf %191, %204 : vector<8x128xf32>
    %206 = arith.mulf %202, %202 : vector<8x1xf32>
    %207 = arith.mulf %190, %190 : vector<1x128xf32>
    %cst_69 = arith.constant dense<0.000000e+00> : vector<1xf32>
    %208 = vector.multi_reduction <add>, %207, %cst_69 [1] : vector<1x128xf32> to vector<1xf32>
    %209 = vector.shape_cast %208 : vector<1xf32> to vector<1x1xf32>
    %210 = vector.broadcast %190 : vector<1x128xf32> to vector<8x128xf32>
    %211 = arith.mulf %205, %210 : vector<8x128xf32>
    %cst_70 = arith.constant dense<0.000000e+00> : vector<8xf32>
    %212 = vector.multi_reduction <add>, %211, %cst_70 [1] : vector<8x128xf32> to vector<8xf32>
    %213 = vector.shape_cast %212 : vector<8xf32> to vector<8x1xf32>
    %cst_71 = arith.constant 2.000000e+00 : f32
    %214 = vector.broadcast %cst_71 : f32 to vector<8x1xf32>
    %215 = arith.mulf %214, %213 : vector<8x1xf32>
    %cst_72 = arith.constant 1.000000e+00 : f32
    %216 = vector.broadcast %cst_72 : f32 to vector<8x1xf32>
    %217 = arith.addf %216, %215 : vector<8x1xf32>
    %218 = vector.broadcast %209 : vector<1x1xf32> to vector<8x1xf32>
    %219 = arith.addf %217, %218 : vector<8x1xf32>
    %220 = vector.broadcast %219 : vector<8x1xf32> to vector<8x128xf32>
    %221 = arith.mulf %220, %205 : vector<8x128xf32>
    %cst_73 = arith.constant 1.000000e+00 : f32
    %222 = vector.broadcast %cst_73 : f32 to vector<8x1xf32>
    %223 = arith.subf %222, %206 : vector<8x1xf32>
    %224 = vector.broadcast %223 : vector<8x1xf32> to vector<8x128xf32>
    %225 = vector.broadcast %190 : vector<1x128xf32> to vector<8x128xf32>
    %226 = arith.mulf %224, %225 : vector<8x128xf32>
    %227 = arith.addf %221, %226 : vector<8x128xf32>
    %cst_74 = arith.constant 2.000000e+00 : f32
    %228 = vector.broadcast %cst_74 : f32 to vector<8x1xf32>
    %229 = arith.mulf %228, %213 : vector<8x1xf32>
    %cst_75 = arith.constant 1.000000e+00 : f32
    %230 = vector.broadcast %cst_75 : f32 to vector<8x1xf32>
    %231 = arith.addf %230, %229 : vector<8x1xf32>
    %232 = vector.broadcast %209 : vector<1x1xf32> to vector<8x1xf32>
    %233 = arith.mulf %206, %232 : vector<8x1xf32>
    %234 = arith.addf %231, %233 : vector<8x1xf32>
    %cst_76 = arith.constant 9.99999997E-7 : f32
    %235 = vector.broadcast %cst_76 : f32 to vector<8x1xf32>
    %236 = arith.addf %234, %235 : vector<8x1xf32>
    %237 = tpu.reciprocal %236 {approx = true} : vector<8x1xf32> -> vector<8x1xf32>
    %238 = vector.broadcast %237 : vector<8x1xf32> to vector<8x128xf32>
    %239 = arith.mulf %227, %238 : vector<8x128xf32>
    %240 = arith.mulf %188, %239 : vector<8x128xf32>
    %cst_77 = arith.constant dense<0.000000e+00> : vector<8xf32>
    %241 = vector.multi_reduction <add>, %240, %cst_77 [1] : vector<8x128xf32> to vector<8xf32>
    %242 = vector.shape_cast %241 : vector<8xf32> to vector<8x1xf32>
    %243 = arith.mulf %239, %239 : vector<8x128xf32>
    %cst_78 = arith.constant dense<0.000000e+00> : vector<8xf32>
    %244 = vector.multi_reduction <add>, %243, %cst_78 [1] : vector<8x128xf32> to vector<8xf32>
    %245 = vector.shape_cast %244 : vector<8xf32> to vector<8x1xf32>
    %cst_79 = arith.constant 2.000000e+00 : f32
    %246 = vector.broadcast %cst_79 : f32 to vector<8x1xf32>
    %247 = arith.mulf %246, %242 : vector<8x1xf32>
    %cst_80 = arith.constant 1.000000e+00 : f32
    %248 = vector.broadcast %cst_80 : f32 to vector<8x1xf32>
    %249 = arith.addf %248, %247 : vector<8x1xf32>
    %250 = arith.addf %249, %245 : vector<8x1xf32>
    %251 = vector.broadcast %250 : vector<8x1xf32> to vector<8x128xf32>
    %252 = arith.mulf %251, %188 : vector<8x128xf32>
    %cst_81 = arith.constant 1.000000e+00 : f32
    %253 = vector.broadcast %cst_81 : f32 to vector<8x1xf32>
    %254 = arith.subf %253, %189 : vector<8x1xf32>
    %255 = vector.broadcast %254 : vector<8x1xf32> to vector<8x128xf32>
    %256 = arith.mulf %255, %239 : vector<8x128xf32>
    %257 = arith.addf %252, %256 : vector<8x128xf32>
    %cst_82 = arith.constant 2.000000e+00 : f32
    %258 = vector.broadcast %cst_82 : f32 to vector<8x1xf32>
    %259 = arith.mulf %258, %242 : vector<8x1xf32>
    %cst_83 = arith.constant 1.000000e+00 : f32
    %260 = vector.broadcast %cst_83 : f32 to vector<8x1xf32>
    %261 = arith.addf %260, %259 : vector<8x1xf32>
    %262 = arith.mulf %189, %245 : vector<8x1xf32>
    %263 = arith.addf %261, %262 : vector<8x1xf32>
    %cst_84 = arith.constant 9.99999997E-7 : f32
    %264 = vector.broadcast %cst_84 : f32 to vector<8x1xf32>
    %265 = arith.addf %263, %264 : vector<8x1xf32>
    %266 = tpu.reciprocal %265 {approx = true} : vector<8x1xf32> -> vector<8x1xf32>
    %267 = vector.broadcast %266 : vector<8x1xf32> to vector<8x128xf32>
    %268 = arith.mulf %257, %267 : vector<8x128xf32>
    %269 = arith.mulf %268, %268 : vector<8x128xf32>
    %cst_85 = arith.constant dense<0.000000e+00> : vector<8xf32>
    %270 = vector.multi_reduction <add>, %269, %cst_85 [1] : vector<8x128xf32> to vector<8xf32>
    %271 = vector.shape_cast %270 : vector<8xf32> to vector<8x1xf32>
    %cst_86 = arith.constant 9.99999997E-7 : f32
    %272 = vector.broadcast %cst_86 : f32 to vector<8x1xf32>
    %273 = arith.addf %271, %272 : vector<8x1xf32>
    %274 = math.sqrt %273 : vector<8x1xf32>
    %cst_87 = arith.constant 0.000000e+00 : f32
    %cst_88 = arith.constant 0.999989986 : f32
    %275 = vector.broadcast %cst_87 : f32 to vector<8x1xf32>
    %276 = arith.maximumf %275, %274 : vector<8x1xf32>
    %277 = vector.broadcast %cst_88 : f32 to vector<8x1xf32>
    %278 = arith.minimumf %277, %276 : vector<8x1xf32>
    %cst_89 = arith.constant 1.000000e+00 : f32
    %279 = vector.broadcast %cst_89 : f32 to vector<8x1xf32>
    %280 = arith.addf %279, %278 : vector<8x1xf32>
    %cst_90 = arith.constant 1.000000e+00 : f32
    %281 = vector.broadcast %cst_90 : f32 to vector<8x1xf32>
    %282 = arith.subf %281, %278 : vector<8x1xf32>
    %283 = arith.divf %280, %282 : vector<8x1xf32>
    %284 = math.log %283 : vector<8x1xf32>
    %cst_91 = arith.constant 5.000000e-01 : f32
    %285 = vector.broadcast %cst_91 : f32 to vector<8x1xf32>
    %286 = arith.mulf %285, %284 : vector<8x1xf32>
    %287 = arith.divf %286, %274 : vector<8x1xf32>
    %288 = vector.broadcast %287 : vector<8x1xf32> to vector<8x128xf32>
    %289 = arith.mulf %268, %288 : vector<8x128xf32>
    %290 = math.tanh %289 : vector<8x128xf32>
    %291 = arith.mulf %290, %290 : vector<8x128xf32>
    %cst_92 = arith.constant dense<0.000000e+00> : vector<8xf32>
    %292 = vector.multi_reduction <add>, %291, %cst_92 [1] : vector<8x128xf32> to vector<8xf32>
    %293 = vector.shape_cast %292 : vector<8xf32> to vector<8x1xf32>
    %cst_93 = arith.constant 9.99999997E-7 : f32
    %294 = vector.broadcast %cst_93 : f32 to vector<8x1xf32>
    %295 = arith.addf %293, %294 : vector<8x1xf32>
    %296 = math.sqrt %295 : vector<8x1xf32>
    %cst_94 = arith.constant 0.000000e+00 : f32
    %cst_95 = arith.constant 1.500000e+01 : f32
    %297 = vector.broadcast %cst_94 : f32 to vector<8x1xf32>
    %298 = arith.maximumf %297, %296 : vector<8x1xf32>
    %299 = vector.broadcast %cst_95 : f32 to vector<8x1xf32>
    %300 = arith.minimumf %299, %298 : vector<8x1xf32>
    %301 = math.tanh %300 : vector<8x1xf32>
    %302 = arith.divf %301, %296 : vector<8x1xf32>
    %303 = vector.broadcast %302 : vector<8x1xf32> to vector<8x128xf32>
    %304 = arith.mulf %290, %303 : vector<8x128xf32>
    %305 = arith.mulf %301, %301 : vector<8x1xf32>
    %c0_96 = arith.constant 0 : index
    %c0_97 = arith.constant 0 : index
    %306 = vector.load %arg7[%c0_96, %c0_97] : memref<1x128xf32, #tpu.memory_space<vmem>>, vector<1x128xf32>
    %307 = vector.extract_strided_slice %24 {offsets = [0, 128], sizes = [8, 128], strides = [1, 1]} : vector<8x384xf32> to vector<8x128xf32>
    %308 = arith.mulf %307, %307 : vector<8x128xf32>
    %cst_98 = arith.constant dense<0.000000e+00> : vector<8xf32>
    %309 = vector.multi_reduction <add>, %308, %cst_98 [1] : vector<8x128xf32> to vector<8xf32>
    %310 = vector.shape_cast %309 : vector<8xf32> to vector<8x1xf32>
    %cst_99 = arith.constant 9.99999997E-7 : f32
    %311 = vector.broadcast %cst_99 : f32 to vector<8x1xf32>
    %312 = arith.addf %310, %311 : vector<8x1xf32>
    %313 = math.sqrt %312 : vector<8x1xf32>
    %cst_100 = arith.constant 0.000000e+00 : f32
    %cst_101 = arith.constant 1.500000e+01 : f32
    %314 = vector.broadcast %cst_100 : f32 to vector<8x1xf32>
    %315 = arith.maximumf %314, %313 : vector<8x1xf32>
    %316 = vector.broadcast %cst_101 : f32 to vector<8x1xf32>
    %317 = arith.minimumf %316, %315 : vector<8x1xf32>
    %318 = math.tanh %317 : vector<8x1xf32>
    %319 = arith.divf %318, %313 : vector<8x1xf32>
    %320 = vector.broadcast %319 : vector<8x1xf32> to vector<8x128xf32>
    %321 = arith.mulf %307, %320 : vector<8x128xf32>
    %322 = arith.mulf %318, %318 : vector<8x1xf32>
    %323 = arith.mulf %306, %306 : vector<1x128xf32>
    %cst_102 = arith.constant dense<0.000000e+00> : vector<1xf32>
    %324 = vector.multi_reduction <add>, %323, %cst_102 [1] : vector<1x128xf32> to vector<1xf32>
    %325 = vector.shape_cast %324 : vector<1xf32> to vector<1x1xf32>
    %326 = vector.broadcast %306 : vector<1x128xf32> to vector<8x128xf32>
    %327 = arith.mulf %321, %326 : vector<8x128xf32>
    %cst_103 = arith.constant dense<0.000000e+00> : vector<8xf32>
    %328 = vector.multi_reduction <add>, %327, %cst_103 [1] : vector<8x128xf32> to vector<8xf32>
    %329 = vector.shape_cast %328 : vector<8xf32> to vector<8x1xf32>
    %cst_104 = arith.constant 2.000000e+00 : f32
    %330 = vector.broadcast %cst_104 : f32 to vector<8x1xf32>
    %331 = arith.mulf %330, %329 : vector<8x1xf32>
    %cst_105 = arith.constant 1.000000e+00 : f32
    %332 = vector.broadcast %cst_105 : f32 to vector<8x1xf32>
    %333 = arith.addf %332, %331 : vector<8x1xf32>
    %334 = vector.broadcast %325 : vector<1x1xf32> to vector<8x1xf32>
    %335 = arith.addf %333, %334 : vector<8x1xf32>
    %336 = vector.broadcast %335 : vector<8x1xf32> to vector<8x128xf32>
    %337 = arith.mulf %336, %321 : vector<8x128xf32>
    %cst_106 = arith.constant 1.000000e+00 : f32
    %338 = vector.broadcast %cst_106 : f32 to vector<8x1xf32>
    %339 = arith.subf %338, %322 : vector<8x1xf32>
    %340 = vector.broadcast %339 : vector<8x1xf32> to vector<8x128xf32>
    %341 = vector.broadcast %306 : vector<1x128xf32> to vector<8x128xf32>
    %342 = arith.mulf %340, %341 : vector<8x128xf32>
    %343 = arith.addf %337, %342 : vector<8x128xf32>
    %cst_107 = arith.constant 2.000000e+00 : f32
    %344 = vector.broadcast %cst_107 : f32 to vector<8x1xf32>
    %345 = arith.mulf %344, %329 : vector<8x1xf32>
    %cst_108 = arith.constant 1.000000e+00 : f32
    %346 = vector.broadcast %cst_108 : f32 to vector<8x1xf32>
    %347 = arith.addf %346, %345 : vector<8x1xf32>
    %348 = vector.broadcast %325 : vector<1x1xf32> to vector<8x1xf32>
    %349 = arith.mulf %322, %348 : vector<8x1xf32>
    %350 = arith.addf %347, %349 : vector<8x1xf32>
    %cst_109 = arith.constant 9.99999997E-7 : f32
    %351 = vector.broadcast %cst_109 : f32 to vector<8x1xf32>
    %352 = arith.addf %350, %351 : vector<8x1xf32>
    %353 = tpu.reciprocal %352 {approx = true} : vector<8x1xf32> -> vector<8x1xf32>
    %354 = vector.broadcast %353 : vector<8x1xf32> to vector<8x128xf32>
    %355 = arith.mulf %343, %354 : vector<8x128xf32>
    %356 = vector.extract_strided_slice %49 {offsets = [0, 128], sizes = [8, 128], strides = [1, 1]} : vector<8x256xf32> to vector<8x128xf32>
    %357 = arith.mulf %356, %356 : vector<8x128xf32>
    %cst_110 = arith.constant dense<0.000000e+00> : vector<8xf32>
    %358 = vector.multi_reduction <add>, %357, %cst_110 [1] : vector<8x128xf32> to vector<8xf32>
    %359 = vector.shape_cast %358 : vector<8xf32> to vector<8x1xf32>
    %cst_111 = arith.constant 9.99999997E-7 : f32
    %360 = vector.broadcast %cst_111 : f32 to vector<8x1xf32>
    %361 = arith.addf %359, %360 : vector<8x1xf32>
    %362 = math.sqrt %361 : vector<8x1xf32>
    %cst_112 = arith.constant 0.000000e+00 : f32
    %cst_113 = arith.constant 1.500000e+01 : f32
    %363 = vector.broadcast %cst_112 : f32 to vector<8x1xf32>
    %364 = arith.maximumf %363, %362 : vector<8x1xf32>
    %365 = vector.broadcast %cst_113 : f32 to vector<8x1xf32>
    %366 = arith.minimumf %365, %364 : vector<8x1xf32>
    %367 = math.tanh %366 : vector<8x1xf32>
    %368 = arith.divf %367, %362 : vector<8x1xf32>
    %369 = vector.broadcast %368 : vector<8x1xf32> to vector<8x128xf32>
    %370 = arith.mulf %356, %369 : vector<8x128xf32>
    %371 = arith.mulf %367, %367 : vector<8x1xf32>
    %372 = arith.mulf %370, %355 : vector<8x128xf32>
    %cst_114 = arith.constant dense<0.000000e+00> : vector<8xf32>
    %373 = vector.multi_reduction <add>, %372, %cst_114 [1] : vector<8x128xf32> to vector<8xf32>
    %374 = vector.shape_cast %373 : vector<8xf32> to vector<8x1xf32>
    %375 = arith.mulf %355, %355 : vector<8x128xf32>
    %cst_115 = arith.constant dense<0.000000e+00> : vector<8xf32>
    %376 = vector.multi_reduction <add>, %375, %cst_115 [1] : vector<8x128xf32> to vector<8xf32>
    %377 = vector.shape_cast %376 : vector<8xf32> to vector<8x1xf32>
    %cst_116 = arith.constant 2.000000e+00 : f32
    %378 = vector.broadcast %cst_116 : f32 to vector<8x1xf32>
    %379 = arith.mulf %378, %374 : vector<8x1xf32>
    %cst_117 = arith.constant 1.000000e+00 : f32
    %380 = vector.broadcast %cst_117 : f32 to vector<8x1xf32>
    %381 = arith.addf %380, %379 : vector<8x1xf32>
    %382 = arith.addf %381, %377 : vector<8x1xf32>
    %383 = vector.broadcast %382 : vector<8x1xf32> to vector<8x128xf32>
    %384 = arith.mulf %383, %370 : vector<8x128xf32>
    %cst_118 = arith.constant 1.000000e+00 : f32
    %385 = vector.broadcast %cst_118 : f32 to vector<8x1xf32>
    %386 = arith.subf %385, %371 : vector<8x1xf32>
    %387 = vector.broadcast %386 : vector<8x1xf32> to vector<8x128xf32>
    %388 = arith.mulf %387, %355 : vector<8x128xf32>
    %389 = arith.addf %384, %388 : vector<8x128xf32>
    %cst_119 = arith.constant 2.000000e+00 : f32
    %390 = vector.broadcast %cst_119 : f32 to vector<8x1xf32>
    %391 = arith.mulf %390, %374 : vector<8x1xf32>
    %cst_120 = arith.constant 1.000000e+00 : f32
    %392 = vector.broadcast %cst_120 : f32 to vector<8x1xf32>
    %393 = arith.addf %392, %391 : vector<8x1xf32>
    %394 = arith.mulf %371, %377 : vector<8x1xf32>
    %395 = arith.addf %393, %394 : vector<8x1xf32>
    %cst_121 = arith.constant 9.99999997E-7 : f32
    %396 = vector.broadcast %cst_121 : f32 to vector<8x1xf32>
    %397 = arith.addf %395, %396 : vector<8x1xf32>
    %398 = tpu.reciprocal %397 {approx = true} : vector<8x1xf32> -> vector<8x1xf32>
    %399 = vector.broadcast %398 : vector<8x1xf32> to vector<8x128xf32>
    %400 = arith.mulf %389, %399 : vector<8x128xf32>
    %401 = arith.mulf %400, %400 : vector<8x128xf32>
    %cst_122 = arith.constant dense<0.000000e+00> : vector<8xf32>
    %402 = vector.multi_reduction <add>, %401, %cst_122 [1] : vector<8x128xf32> to vector<8xf32>
    %403 = vector.shape_cast %402 : vector<8xf32> to vector<8x1xf32>
    %cst_123 = arith.constant 9.99999997E-7 : f32
    %404 = vector.broadcast %cst_123 : f32 to vector<8x1xf32>
    %405 = arith.addf %403, %404 : vector<8x1xf32>
    %406 = math.sqrt %405 : vector<8x1xf32>
    %cst_124 = arith.constant 0.000000e+00 : f32
    %cst_125 = arith.constant 0.999989986 : f32
    %407 = vector.broadcast %cst_124 : f32 to vector<8x1xf32>
    %408 = arith.maximumf %407, %406 : vector<8x1xf32>
    %409 = vector.broadcast %cst_125 : f32 to vector<8x1xf32>
    %410 = arith.minimumf %409, %408 : vector<8x1xf32>
    %cst_126 = arith.constant 1.000000e+00 : f32
    %411 = vector.broadcast %cst_126 : f32 to vector<8x1xf32>
    %412 = arith.addf %411, %410 : vector<8x1xf32>
    %cst_127 = arith.constant 1.000000e+00 : f32
    %413 = vector.broadcast %cst_127 : f32 to vector<8x1xf32>
    %414 = arith.subf %413, %410 : vector<8x1xf32>
    %415 = arith.divf %412, %414 : vector<8x1xf32>
    %416 = math.log %415 : vector<8x1xf32>
    %cst_128 = arith.constant 5.000000e-01 : f32
    %417 = vector.broadcast %cst_128 : f32 to vector<8x1xf32>
    %418 = arith.mulf %417, %416 : vector<8x1xf32>
    %419 = arith.divf %418, %406 : vector<8x1xf32>
    %420 = vector.broadcast %419 : vector<8x1xf32> to vector<8x128xf32>
    %421 = arith.mulf %400, %420 : vector<8x128xf32>
    %422 = arith.negf %421 : vector<8x128xf32>
    %423 = math.exp %422 : vector<8x128xf32>
    %cst_129 = arith.constant 1.000000e+00 : f32
    %424 = vector.broadcast %cst_129 : f32 to vector<8x128xf32>
    %425 = arith.addf %424, %423 : vector<8x128xf32>
    %426 = arith.divf %424, %425 : vector<8x128xf32>
    %cst_130 = arith.constant 0.000000e+00 : f32
    %427 = vector.broadcast %cst_130 : f32 to vector<8x128xf32>
    %428 = arith.subf %427, %25 : vector<8x128xf32>
    %429 = arith.mulf %428, %304 : vector<8x128xf32>
    %cst_131 = arith.constant dense<0.000000e+00> : vector<8xf32>
    %430 = vector.multi_reduction <add>, %429, %cst_131 [1] : vector<8x128xf32> to vector<8xf32>
    %431 = vector.shape_cast %430 : vector<8xf32> to vector<8x1xf32>
    %cst_132 = arith.constant 2.000000e+00 : f32
    %432 = vector.broadcast %cst_132 : f32 to vector<8x1xf32>
    %433 = arith.mulf %432, %431 : vector<8x1xf32>
    %cst_133 = arith.constant 1.000000e+00 : f32
    %434 = vector.broadcast %cst_133 : f32 to vector<8x1xf32>
    %435 = arith.addf %434, %433 : vector<8x1xf32>
    %436 = arith.addf %435, %305 : vector<8x1xf32>
    %437 = vector.broadcast %436 : vector<8x1xf32> to vector<8x128xf32>
    %438 = arith.mulf %437, %428 : vector<8x128xf32>
    %cst_134 = arith.constant 1.000000e+00 : f32
    %439 = vector.broadcast %cst_134 : f32 to vector<8x1xf32>
    %440 = arith.subf %439, %28 : vector<8x1xf32>
    %441 = vector.broadcast %440 : vector<8x1xf32> to vector<8x128xf32>
    %442 = arith.mulf %441, %304 : vector<8x128xf32>
    %443 = arith.addf %438, %442 : vector<8x128xf32>
    %cst_135 = arith.constant 2.000000e+00 : f32
    %444 = vector.broadcast %cst_135 : f32 to vector<8x1xf32>
    %445 = arith.mulf %444, %431 : vector<8x1xf32>
    %cst_136 = arith.constant 1.000000e+00 : f32
    %446 = vector.broadcast %cst_136 : f32 to vector<8x1xf32>
    %447 = arith.addf %446, %445 : vector<8x1xf32>
    %448 = arith.mulf %28, %305 : vector<8x1xf32>
    %449 = arith.addf %447, %448 : vector<8x1xf32>
    %cst_137 = arith.constant 9.99999997E-7 : f32
    %450 = vector.broadcast %cst_137 : f32 to vector<8x1xf32>
    %451 = arith.addf %449, %450 : vector<8x1xf32>
    %452 = tpu.reciprocal %451 {approx = true} : vector<8x1xf32> -> vector<8x1xf32>
    %453 = vector.broadcast %452 : vector<8x1xf32> to vector<8x128xf32>
    %454 = arith.mulf %443, %453 : vector<8x128xf32>
    %455 = arith.mulf %454, %454 : vector<8x128xf32>
    %cst_138 = arith.constant dense<0.000000e+00> : vector<8xf32>
    %456 = vector.multi_reduction <add>, %455, %cst_138 [1] : vector<8x128xf32> to vector<8xf32>
    %457 = vector.shape_cast %456 : vector<8xf32> to vector<8x1xf32>
    %cst_139 = arith.constant 9.99999997E-7 : f32
    %458 = vector.broadcast %cst_139 : f32 to vector<8x1xf32>
    %459 = arith.addf %457, %458 : vector<8x1xf32>
    %460 = math.sqrt %459 : vector<8x1xf32>
    %cst_140 = arith.constant 0.000000e+00 : f32
    %cst_141 = arith.constant 0.999989986 : f32
    %461 = vector.broadcast %cst_140 : f32 to vector<8x1xf32>
    %462 = arith.maximumf %461, %460 : vector<8x1xf32>
    %463 = vector.broadcast %cst_141 : f32 to vector<8x1xf32>
    %464 = arith.minimumf %463, %462 : vector<8x1xf32>
    %cst_142 = arith.constant 1.000000e+00 : f32
    %465 = vector.broadcast %cst_142 : f32 to vector<8x1xf32>
    %466 = arith.addf %465, %464 : vector<8x1xf32>
    %cst_143 = arith.constant 1.000000e+00 : f32
    %467 = vector.broadcast %cst_143 : f32 to vector<8x1xf32>
    %468 = arith.subf %467, %464 : vector<8x1xf32>
    %469 = arith.divf %466, %468 : vector<8x1xf32>
    %470 = math.log %469 : vector<8x1xf32>
    %cst_144 = arith.constant 5.000000e-01 : f32
    %471 = vector.broadcast %cst_144 : f32 to vector<8x1xf32>
    %472 = arith.mulf %471, %470 : vector<8x1xf32>
    %473 = arith.divf %472, %460 : vector<8x1xf32>
    %474 = vector.broadcast %473 : vector<8x1xf32> to vector<8x128xf32>
    %475 = arith.mulf %454, %474 : vector<8x128xf32>
    %476 = arith.mulf %426, %475 : vector<8x128xf32>
    %477 = arith.mulf %476, %476 : vector<8x128xf32>
    %cst_145 = arith.constant dense<0.000000e+00> : vector<8xf32>
    %478 = vector.multi_reduction <add>, %477, %cst_145 [1] : vector<8x128xf32> to vector<8xf32>
    %479 = vector.shape_cast %478 : vector<8xf32> to vector<8x1xf32>
    %cst_146 = arith.constant 9.99999997E-7 : f32
    %480 = vector.broadcast %cst_146 : f32 to vector<8x1xf32>
    %481 = arith.addf %479, %480 : vector<8x1xf32>
    %482 = math.sqrt %481 : vector<8x1xf32>
    %cst_147 = arith.constant 0.000000e+00 : f32
    %cst_148 = arith.constant 1.500000e+01 : f32
    %483 = vector.broadcast %cst_147 : f32 to vector<8x1xf32>
    %484 = arith.maximumf %483, %482 : vector<8x1xf32>
    %485 = vector.broadcast %cst_148 : f32 to vector<8x1xf32>
    %486 = arith.minimumf %485, %484 : vector<8x1xf32>
    %487 = math.tanh %486 : vector<8x1xf32>
    %488 = arith.divf %487, %482 : vector<8x1xf32>
    %489 = vector.broadcast %488 : vector<8x1xf32> to vector<8x128xf32>
    %490 = arith.mulf %476, %489 : vector<8x128xf32>
    %491 = arith.mulf %487, %487 : vector<8x1xf32>
    %492 = arith.mulf %25, %490 : vector<8x128xf32>
    %cst_149 = arith.constant dense<0.000000e+00> : vector<8xf32>
    %493 = vector.multi_reduction <add>, %492, %cst_149 [1] : vector<8x128xf32> to vector<8xf32>
    %494 = vector.shape_cast %493 : vector<8xf32> to vector<8x1xf32>
    %cst_150 = arith.constant 2.000000e+00 : f32
    %495 = vector.broadcast %cst_150 : f32 to vector<8x1xf32>
    %496 = arith.mulf %495, %494 : vector<8x1xf32>
    %cst_151 = arith.constant 1.000000e+00 : f32
    %497 = vector.broadcast %cst_151 : f32 to vector<8x1xf32>
    %498 = arith.addf %497, %496 : vector<8x1xf32>
    %499 = arith.addf %498, %491 : vector<8x1xf32>
    %500 = vector.broadcast %499 : vector<8x1xf32> to vector<8x128xf32>
    %501 = arith.mulf %500, %25 : vector<8x128xf32>
    %cst_152 = arith.constant 1.000000e+00 : f32
    %502 = vector.broadcast %cst_152 : f32 to vector<8x1xf32>
    %503 = arith.subf %502, %28 : vector<8x1xf32>
    %504 = vector.broadcast %503 : vector<8x1xf32> to vector<8x128xf32>
    %505 = arith.mulf %504, %490 : vector<8x128xf32>
    %506 = arith.addf %501, %505 : vector<8x128xf32>
    %cst_153 = arith.constant 2.000000e+00 : f32
    %507 = vector.broadcast %cst_153 : f32 to vector<8x1xf32>
    %508 = arith.mulf %507, %494 : vector<8x1xf32>
    %cst_154 = arith.constant 1.000000e+00 : f32
    %509 = vector.broadcast %cst_154 : f32 to vector<8x1xf32>
    %510 = arith.addf %509, %508 : vector<8x1xf32>
    %511 = arith.mulf %28, %491 : vector<8x1xf32>
    %512 = arith.addf %510, %511 : vector<8x1xf32>
    %cst_155 = arith.constant 9.99999997E-7 : f32
    %513 = vector.broadcast %cst_155 : f32 to vector<8x1xf32>
    %514 = arith.addf %512, %513 : vector<8x1xf32>
    %515 = vector.broadcast %514 : vector<8x1xf32> to vector<8x128xf32>
    %516 = arith.divf %506, %515 : vector<8x128xf32>
    %c0_156 = arith.constant 0 : index
    %c0_157 = arith.constant 0 : index
    %517 = vector.load %arg9[%c0_156, %c0_157] : memref<8x128xf32, #tpu.memory_space<vmem>>, vector<8x128xf32>
    tpu.vector_store %arg9[%c0_156, %c0_157], %516 {strides = array<i32>} : memref<8x128xf32, #tpu.memory_space<vmem>>, vector<8x128xf32>,
    return
  }
  func.func @transform_0(%arg0: i32) -> (i32, i32) {
    %c0_i32 = arith.constant 0 : i32
    %c0_i32_0 = arith.constant 0 : i32
    return %arg0, %c0_i32 : i32, i32
  }
  func.func @transform_1(%arg0: i32) -> (i32, i32) {
    %c0_i32 = arith.constant 0 : i32
    %c0_i32_0 = arith.constant 0 : i32
    return %arg0, %c0_i32 : i32, i32
  }
  func.func @transform_2(%arg0: i32) -> (i32, i32) {
    %c0_i32 = arith.constant 0 : i32
    %c0_i32_0 = arith.constant 0 : i32
    %c0_i32_1 = arith.constant 0 : i32
    return %c0_i32, %c0_i32_0 : i32, i32
  }
  func.func @transform_3(%arg0: i32) -> (i32, i32) {
    %c0_i32 = arith.constant 0 : i32
    %c0_i32_0 = arith.constant 0 : i32
    %c0_i32_1 = arith.constant 0 : i32
    return %c0_i32, %c0_i32_0 : i32, i32
  }
  func.func @transform_4(%arg0: i32) -> (i32, i32) {
    %c0_i32 = arith.constant 0 : i32
    %c0_i32_0 = arith.constant 0 : i32
    %c0_i32_1 = arith.constant 0 : i32
    return %c0_i32, %c0_i32_0 : i32, i32
  }
  func.func @transform_5(%arg0: i32) -> (i32, i32) {
    %c0_i32 = arith.constant 0 : i32
    %c0_i32_0 = arith.constant 0 : i32
    %c0_i32_1 = arith.constant 0 : i32
    return %c0_i32, %c0_i32_0 : i32, i32
  }
  func.func @transform_6(%arg0: i32) -> (i32, i32) {
    %c0_i32 = arith.constant 0 : i32
    %c0_i32_0 = arith.constant 0 : i32
    %c0_i32_1 = arith.constant 0 : i32
    return %c0_i32, %c0_i32_0 : i32, i32
  }
  func.func @transform_7(%arg0: i32) -> (i32, i32) {
    %c0_i32 = arith.constant 0 : i32
    %c0_i32_0 = arith.constant 0 : i32
    %c0_i32_1 = arith.constant 0 : i32
    return %c0_i32, %c0_i32_0 : i32, i32
  }
  func.func @transform_8(%arg0: i32) -> (i32, i32) {
    %c0_i32 = arith.constant 0 : i32
    %c0_i32_0 = arith.constant 0 : i32
    return %arg0, %c0_i32 : i32, i32
  }
}

</mosaic_0001>

<llo_original>
// kernel: gru_cell.1
$region0: #{gru_cell.1}
  #allocation0 [shape = 'u32[]', space=smem, size = 0x4, offset = 0x4, fixed_abs, tag = 'smem constant byte address 0x4 - core index']
  #allocation1 [shape = 'u32[144,128]{1,0:T(1,128)}', space=vmem, size = 0x12000, scoped, tag = 'internal scratch']
  %s0 = inlined_call_operand.vmem [shape: f32[8,128], index: 0, kind: input, shape index: {}]
  %s1 = inlined_call_operand.vmem [shape: f32[8,128], index: 1, kind: input, shape index: {}]
  %s2 = inlined_call_operand.hbm [shape: bf16[128,384], index: 2, kind: input, shape index: {}]
  %s3 = inlined_call_operand.hbm [shape: bf16[128,256], index: 3, kind: input, shape index: {}]
  %s4 = inlined_call_operand.hbm [shape: bf16[128,128], index: 4, kind: input, shape index: {}]
  %s5 = inlined_call_operand.vmem [shape: f32[1,128], index: 5, kind: input, shape index: {}]
  %s6 = inlined_call_operand.vmem [shape: f32[1,128], index: 6, kind: input, shape index: {}]
  %s7 = inlined_call_operand.vmem [shape: f32[1,128], index: 7, kind: input, shape index: {}]
  %s8 = inlined_call_operand.hbm [shape: f32[8,128], index: 8, kind: output, shape index: {}]
  %s9 = sld [smem:[#allocation0]]
  $region54: #{gru_cell.1} parent=0
    _
  %s11 = ssub.s32 1, %s9
  %s12 = scalar_select 0, %s11, %s9
  $region1: #{gru_cell.1} parent=0
    #allocation2 [shape = 'u8[98304]{0}', space=vmem, size = 0x18000, scoped, tag = 'input window, operand 2, single buffered']
    #allocation3 [shape = 's32[1]{0}', space=sflag, size = 0x4, scoped, tag = 'scoped memory for gru_cell.1']
    #allocation4 [shape = 's32[1]{0}', space=sflag, size = 0x4, scoped, tag = 'scoped memory for gru_cell.1']
    #allocation5 [shape = 'u8[65536]{0}', space=vmem, size = 0x10000, scoped, tag = 'input window, operand 3, single buffered']
    #allocation6 [shape = 's32[1]{0}', space=sflag, size = 0x4, scoped, tag = 'scoped memory for gru_cell.1']
    #allocation7 [shape = 'u8[32768]{0}', space=vmem, size = 0x8000, scoped, tag = 'input window, operand 4, single buffered']
    #allocation8 [shape = 'u8[4096]{0}', space=vmem, size = 0x1000, scoped, tag = 'output window, operand 0, single buffered']
    %13 = vsyncpa [#allocation3], 0
    %14 = vsyncpa [#allocation6], 0
    %15 = vsyncpa [#allocation4], 0
    // Predicated region
    $region2: #{gru_cell.1} parent=1 // pred_check
      _
    $region3: #{gru_cell.1} parent=1 // pred_check_branch
      %17 = sbr.rel (0) target = $region5
    $region4: #{gru_cell.1} parent=1 // pred_region
      _
    $region5: #{gru_cell.1} parent=1 // pred_fallthru
      _
    // Predicated region
    $region6: #{gru_cell.1} parent=1 // pred_check
      _
    $region7: #{gru_cell.1} parent=1 // pred_check_branch
      %19 = sbr.rel (0) target = $region9
    $region8: #{gru_cell.1} parent=1 // pred_region
      _
    $region9: #{gru_cell.1} parent=1 // pred_fallthru
      _
    // Predicated region
    $region10: #{gru_cell.1} parent=1 // pred_check
      _
    $region11: #{gru_cell.1} parent=1 // pred_check_branch
      %21 = sbr.rel (0) target = $region13
    $region12: #{gru_cell.1} parent=1 // pred_region
      %s23 = ssub.s32 3072, 3072
      %24 = vsyncadd [#allocation3], %s23
      %s25 = sshll.u32 [#allocation2], 4
      %s26 = int_to_ptr.vmem [resolvable:$true] %s25
      %31 = dma.hbm_to_vmem [thread:$0]  %s2, 3072, %s26, [#allocation3], 192, 192, 12
    $region13: #{gru_cell.1} parent=1 // pred_fallthru
      _
    // Predicated region
    $region14: #{gru_cell.1} parent=1 // pred_check
      _
    $region15: #{gru_cell.1} parent=1 // pred_check_branch
      %33 = sbr.rel (0) target = $region17
    $region16: #{gru_cell.1} parent=1 // pred_region
      %s35 = ssub.s32 2048, 2048
      %36 = vsyncadd [#allocation6], %s35
      %s37 = sshll.u32 [#allocation5], 4
      %s38 = int_to_ptr.vmem [resolvable:$true] %s37
      %43 = dma.hbm_to_vmem [thread:$0]  %s3, 2048, %s38, [#allocation6], 128, 128, 8
    $region17: #{gru_cell.1} parent=1 // pred_fallthru
      _
    // Predicated region
    $region18: #{gru_cell.1} parent=1 // pred_check
      _
    $region19: #{gru_cell.1} parent=1 // pred_check_branch
      %45 = sbr.rel (0) target = $region21
    $region20: #{gru_cell.1} parent=1 // pred_region
      %s47 = ssub.s32 1024, 1024
      %48 = vsyncadd [#allocation6], %s47
      %s49 = sshll.u32 [#allocation7], 4
      %s50 = int_to_ptr.vmem [resolvable:$true] %s49
      %55 = dma.hbm_to_vmem [thread:$0]  %s4, 1024, %s50, [#allocation6], 64, 64, 4
    $region21: #{gru_cell.1} parent=1 // pred_fallthru
      _
    // Predicated region
    $region22: #{gru_cell.1} parent=1 // pred_check
      _
    $region23: #{gru_cell.1} parent=1 // pred_check_branch
      %57 = sbr.rel (0) target = $region25
    $region24: #{gru_cell.1} parent=1 // pred_region
      _
    $region25: #{gru_cell.1} parent=1 // pred_fallthru
      _
    // Predicated region
    $region26: #{gru_cell.1} parent=1 // pred_check
      _
    $region27: #{gru_cell.1} parent=1 // pred_check_branch
      %59 = sbr.rel (0) target = $region29
    $region28: #{gru_cell.1} parent=1 // pred_region
      _
    $region29: #{gru_cell.1} parent=1 // pred_fallthru
      _
    // Predicated region
    $region30: #{gru_cell.1} parent=1 // pred_check
      _
    $region31: #{gru_cell.1} parent=1 // pred_check_branch
      %61 = sbr.rel (0) target = $region33
    $region32: #{gru_cell.1} parent=1 // pred_region
      _
    $region33: #{gru_cell.1} parent=1 // pred_fallthru
      _
    // Predicated region
    $region34: #{gru_cell.1} parent=1 // pred_check
      _
    $region35: #{gru_cell.1} parent=1 // pred_check_branch
      %63 = sbr.rel (0) target = $region37
    $region36: #{gru_cell.1} parent=1 // pred_region
      %64 = dma.done [#allocation3], 3072
    $region37: #{gru_cell.1} parent=1 // pred_fallthru
      _
    // Predicated region
    $region38: #{gru_cell.1} parent=1 // pred_check
      _
    $region39: #{gru_cell.1} parent=1 // pred_check_branch
      %66 = sbr.rel (0) target = $region41
    $region40: #{gru_cell.1} parent=1 // pred_region
      %67 = dma.done [#allocation6], 2048
    $region41: #{gru_cell.1} parent=1 // pred_fallthru
      _
    // Predicated region
    $region42: #{gru_cell.1} parent=1 // pred_check
      _
    $region43: #{gru_cell.1} parent=1 // pred_check_branch
      %69 = sbr.rel (0) target = $region45
    $region44: #{gru_cell.1} parent=1 // pred_region
      %70 = dma.done [#allocation6], 1024
    $region45: #{gru_cell.1} parent=1 // pred_fallthru
      _
    %v72 = vld [vmem:[%s0] sm:$0xff]
    %v73 = vmul.f32 %v72, %v72
    %74 = vadd.xlane.f32.xlu0 %v73
    %v75 = vpop.xlane.xlu0 %74
    %v76 = vadd.f32 %v75, 1e-06
    %v77 = vrsqrt.pop %v76
    %v78 = vmul.f32 %v76, %v77
    %vm79 = vcmp.eq.f32.partialorder %v76, inf
    %v80 = vsel %vm79, %v76, %v78
    %vm81 = vcmp.eq.f32.partialorder %v76, 0.0
    %v82 = vand.u32 %v76, 2147483648
    %v83 = vsel %vm81, %v82, %v80
    %v84 = vmax.f32 %v83, 0.0
    %v85 = vmin.f32 %v84, 0.99999
    %v86 = vadd.f32 %v85, 1.0
    %v87 = vsub.f32 1.0, %v85
    %v88 = vrcp.pop %v87
    %v89 = vmul.f32 %v86, %v88
    %v90 = vlog2.pop %v89
    %v91 = vmul.f32 %v90, 0.6931472
    %v92 = vmul.f32 %v91, 0.5
    %v93 = vrcp.pop %v83
    %v94 = vmul.f32 %v92, %v93
    %v95 = vmul.f32 %v72, %v94
    %v96 = vpack.c.bf16 %v95, %v95
    %v97 = vld [vmem:[#allocation2] sm:$0xff]
    %v98 = vld [vmem:[#allocation2 + $0x8] sm:$0xf]
    %v99 = vld [vmem:[#allocation2 + $0xc] sm:$0xff]
    %v100 = vld [vmem:[#allocation2 + $0x14] sm:$0xf]
    %v101 = vld [vmem:[#allocation2 + $0x18] sm:$0xff]
    %v102 = vld [vmem:[#allocation2 + $0x20] sm:$0xf]
    %v103 = vld [vmem:[#allocation2 + $0x24] sm:$0xff]
    %v104 = vld [vmem:[#allocation2 + $0x2c] sm:$0xf]
    %v105 = vld [vmem:[#allocation2 + $0x30] sm:$0xff]
    %v106 = vld [vmem:[#allocation2 + $0x38] sm:$0xf]
    %v107 = vld [vmem:[#allocation2 + $0x3c] sm:$0xff]
    %v108 = vld [vmem:[#allocation2 + $0x44] sm:$0xf]
    %v109 = vld [vmem:[#allocation2 + $0x48] sm:$0xff]
    %v110 = vld [vmem:[#allocation2 + $0x50] sm:$0xf]
    %v111 = vld [vmem:[#allocation2 + $0x54] sm:$0xff]
    %v112 = vld [vmem:[#allocation2 + $0x5c] sm:$0xf]
    %v113 = vld [vmem:[#allocation2 + $0x60] sm:$0xff]
    %v114 = vld [vmem:[#allocation2 + $0x68] sm:$0xf]
    %v115 = vld [vmem:[#allocation2 + $0x6c] sm:$0xff]
    %v116 = vld [vmem:[#allocation2 + $0x74] sm:$0xf]
    %v117 = vld [vmem:[#allocation2 + $0x78] sm:$0xff]
    %v118 = vld [vmem:[#allocation2 + $0x80] sm:$0xf]
    %v119 = vld [vmem:[#allocation2 + $0x84] sm:$0xff]
    %v120 = vld [vmem:[#allocation2 + $0x8c] sm:$0xf]
    %v121 = vld [vmem:[#allocation2 + $0x90] sm:$0xff]
    %v122 = vld [vmem:[#allocation2 + $0x98] sm:$0xf]
    %v123 = vld [vmem:[#allocation2 + $0x9c] sm:$0xff]
    %v124 = vld [vmem:[#allocation2 + $0xa4] sm:$0xf]
    %v125 = vld [vmem:[#allocation2 + $0xa8] sm:$0xff]
    %v126 = vld [vmem:[#allocation2 + $0xb0] sm:$0xf]
    %v127 = vld [vmem:[#allocation2 + $0xb4] sm:$0xff]
    %v128 = vld [vmem:[#allocation2 + $0xbc] sm:$0xf]
    %v161 = vunpack.c.l.b16 %v97
    %v162 = vunpack.c.h.b16 %v97
    %v163 = vunpack.c.l.b16 %v98
    %v164 = vunpack.c.l.b16 %v99
    %v165 = vunpack.c.h.b16 %v99
    %v166 = vunpack.c.l.b16 %v100
    %v167 = vunpack.c.l.b16 %v101
    %v168 = vunpack.c.h.b16 %v101
    %v169 = vunpack.c.l.b16 %v102
    %v170 = vunpack.c.l.b16 %v103
    %v171 = vunpack.c.h.b16 %v103
    %v172 = vunpack.c.l.b16 %v104
    %v173 = vunpack.c.l.b16 %v105
    %v174 = vunpack.c.h.b16 %v105
    %v175 = vunpack.c.l.b16 %v106
    %v176 = vunpack.c.l.b16 %v107
    %v177 = vunpack.c.h.b16 %v107
    %v178 = vunpack.c.l.b16 %v108
    %v179 = vunpack.c.l.b16 %v109
    %v180 = vunpack.c.h.b16 %v109
    %v181 = vunpack.c.l.b16 %v110
    %v182 = vunpack.c.l.b16 %v111
    %v183 = vunpack.c.h.b16 %v111
    %v184 = vunpack.c.l.b16 %v112
    %v185 = vunpack.c.l.b16 %v113
    %v186 = vunpack.c.h.b16 %v113
    %v187 = vunpack.c.l.b16 %v114
    %v188 = vunpack.c.l.b16 %v115
    %v189 = vunpack.c.h.b16 %v115
    %v190 = vunpack.c.l.b16 %v116
    %v191 = vunpack.c.l.b16 %v117
    %v192 = vunpack.c.h.b16 %v117
    %v193 = vunpack.c.l.b16 %v118
    %v194 = vunpack.c.l.b16 %v119
    %v195 = vunpack.c.h.b16 %v119
    %v196 = vunpack.c.l.b16 %v120
    %v197 = vunpack.c.l.b16 %v121
    %v198 = vunpack.c.h.b16 %v121
    %v199 = vunpack.c.l.b16 %v122
    %v200 = vunpack.c.l.b16 %v123
    %v201 = vunpack.c.h.b16 %v123
    %v202 = vunpack.c.l.b16 %v124
    %v203 = vunpack.c.l.b16 %v125
    %v204 = vunpack.c.h.b16 %v125
    %v205 = vunpack.c.l.b16 %v126
    %v206 = vunpack.c.l.b16 %v127
    %v207 = vunpack.c.h.b16 %v127
    %v208 = vunpack.c.l.b16 %v128
    %v209 = vpack.c.b16 %v164, %v161
    %v210 = vpack.c.b16 %v165, %v162
    %v211 = vpack.c.b16 %v166, %v163
    %v212 = vpack.c.b16 %v170, %v167
    %v213 = vpack.c.b16 %v171, %v168
    %v214 = vpack.c.b16 %v172, %v169
    %v215 = vpack.c.b16 %v176, %v173
    %v216 = vpack.c.b16 %v177, %v174
    %v217 = vpack.c.b16 %v178, %v175
    %v218 = vpack.c.b16 %v182, %v179
    %v219 = vpack.c.b16 %v183, %v180
    %v220 = vpack.c.b16 %v184, %v181
    %v221 = vpack.c.b16 %v188, %v185
    %v222 = vpack.c.b16 %v189, %v186
    %v223 = vpack.c.b16 %v190, %v187
    %v224 = vpack.c.b16 %v194, %v191
    %v225 = vpack.c.b16 %v195, %v192
    %v226 = vpack.c.b16 %v196, %v193
    %v227 = vpack.c.b16 %v200, %v197
    %v228 = vpack.c.b16 %v201, %v198
    %v229 = vpack.c.b16 %v202, %v199
    %v230 = vpack.c.b16 %v206, %v203
    %v231 = vpack.c.b16 %v207, %v204
    %v232 = vpack.c.b16 %v208, %v205
    %257 = vmatprep.subr.bf16.mxu0 %v231
    %258 = vmatpush1.bf16.msra.mxu0 %v230
    %259 = vmatprep.subr.bf16.mxu0 %v228
    %260 = vmatpush1.bf16.msra.mxu0 %v227
    %261 = vmatprep.subr.bf16.mxu0 %v225
    %262 = vmatpush1.bf16.msra.mxu0 %v224
    %263 = vmatprep.subr.bf16.mxu0 %v222
    %264 = vmatpush1.bf16.msra.mxu0 %v221
    %265 = vmatprep.subr.bf16.mxu0 %v219
    %266 = vmatpush1.bf16.msra.mxu0 %v218
    %267 = vmatprep.subr.bf16.mxu0 %v216
    %268 = vmatpush1.bf16.msra.mxu0 %v215
    %269 = vmatprep.subr.bf16.mxu0 %v213
    %270 = vmatpush1.bf16.msra.mxu0 %v212
    %271 = vmatprep.subr.bf16.mxu0 %v210
    %272 = vmatpush1.bf16.msra.mxu0 %v209
    %273 = vmatprep.subr.bf16.mxu0 0
    %274 = vmatpush2.bf16.msra.mxu0 0
    %275 = vmatprep.subr.bf16.mxu0 0
    %276 = vmatpush2.bf16.msra.mxu0 0
    %277 = vmatprep.subr.bf16.mxu0 0
    %278 = vmatpush2.bf16.msra.mxu0 0
    %279 = vmatprep.subr.bf16.mxu0 0
    %280 = vmatpush2.bf16.msra.mxu0 0
    %281 = vmatprep.subr.bf16.mxu0 0
    %282 = vmatpush2.bf16.msra.mxu0 0
    %283 = vmatprep.subr.bf16.mxu0 0
    %284 = vmatpush2.bf16.msra.mxu0 0
    %285 = vmatprep.subr.bf16.mxu0 0
    %286 = vmatpush2.bf16.msra.mxu0 0
    %287 = vmatprep.subr.bf16.mxu0 0
    %288 = vmatpush2.bf16.msra.mxu0 0
    %289 = vmatprep.mubr.bf16.mxu0 0
    %290 = vmatmul.mubr.bf16.gmra.mxu0 %v96
    %v291 = vpop.f32.mrf.mxu0
    %v292 = vadd.f32 0.0, %v291
    %v293 = vpop.f32.mrf.mxu0
    %v294 = vadd.f32 0.0, %v293
    %v295 = vpop.f32.mrf.mxu0
    %v296 = vpop.f32.mrf.mxu0
    %297 = vdwg.mxu0
    %298 = vmatprep.subr.bf16.mxu0 0
    %299 = vmatpush1.bf16.msra.mxu0 %v232
    %300 = vmatprep.subr.bf16.mxu0 0
    %301 = vmatpush1.bf16.msra.mxu0 %v229
    %302 = vmatprep.subr.bf16.mxu0 0
    %303 = vmatpush1.bf16.msra.mxu0 %v226
    %304 = vmatprep.subr.bf16.mxu0 0
    %305 = vmatpush1.bf16.msra.mxu0 %v223
    %306 = vmatprep.subr.bf16.mxu0 0
    %307 = vmatpush1.bf16.msra.mxu0 %v220
    %308 = vmatprep.subr.bf16.mxu0 0
    %309 = vmatpush1.bf16.msra.mxu0 %v217
    %310 = vmatprep.subr.bf16.mxu0 0
    %311 = vmatpush1.bf16.msra.mxu0 %v214
    %312 = vmatprep.subr.bf16.mxu0 0
    %313 = vmatpush1.bf16.msra.mxu0 %v211
    %314 = vmatprep.subr.bf16.mxu0 0
    %315 = vmatpush2.bf16.msra.mxu0 0
    %316 = vmatprep.subr.bf16.mxu0 0
    %317 = vmatpush2.bf16.msra.mxu0 0
    %318 = vmatprep.subr.bf16.mxu0 0
    %319 = vmatpush2.bf16.msra.mxu0 0
    %320 = vmatprep.subr.bf16.mxu0 0
    %321 = vmatpush2.bf16.msra.mxu0 0
    %322 = vmatprep.subr.bf16.mxu0 0
    %323 = vmatpush2.bf16.msra.mxu0 0
    %324 = vmatprep.subr.bf16.mxu0 0
    %325 = vmatpush2.bf16.msra.mxu0 0
    %326 = vmatprep.subr.bf16.mxu0 0
    %327 = vmatpush2.bf16.msra.mxu0 0
    %328 = vmatprep.subr.bf16.mxu0 0
    %329 = vmatpush2.bf16.msra.mxu0 0
    %330 = vmatprep.mubr.bf16.mxu0 0
    %331 = vmatmul.mubr.bf16.gmra.mxu0 %v96
    %v332 = vpop.f32.mrf.mxu0
    %v333 = vadd.f32 0.0, %v332
    %v334 = vpop.f32.mrf.mxu0
    %v335 = vpop.f32.mrf.mxu0
    %v336 = vpop.f32.mrf.mxu0
    %337 = vdwg.mxu0
    %v338 = vld [vmem:[%s1] sm:$0xff]
    %v339 = vmul.f32 %v338, %v338
    %340 = vadd.xlane.f32.xlu0 %v339
    %v341 = vpop.xlane.xlu0 %340
    %v342 = vadd.f32 %v341, 1e-06
    %v343 = vrsqrt.pop %v342
    %v344 = vmul.f32 %v342, %v343
    %vm345 = vcmp.eq.f32.partialorder %v342, inf
    %v346 = vsel %vm345, %v342, %v344
    %vm347 = vcmp.eq.f32.partialorder %v342, 0.0
    %v348 = vand.u32 %v342, 2147483648
    %v349 = vsel %vm347, %v348, %v346
    %v350 = vmax.f32 %v349, 0.0
    %v351 = vmin.f32 %v350, 0.99999
    %v352 = vadd.f32 %v351, 1.0
    %v353 = vsub.f32 1.0, %v351
    %v354 = vrcp.pop %v353
    %v355 = vmul.f32 %v352, %v354
    %v356 = vlog2.pop %v355
    %v357 = vmul.f32 %v356, 0.6931472
    %v358 = vmul.f32 %v357, 0.5
    %v359 = vrcp.pop %v349
    %v360 = vmul.f32 %v358, %v359
    %v361 = vmul.f32 %v338, %v360
    %v362 = vpack.c.bf16 %v361, %v361
    %v363 = vld [vmem:[#allocation5] sm:$0xff]
    %v364 = vld [vmem:[#allocation5 + $0x8] sm:$0xff]
    %v365 = vld [vmem:[#allocation5 + $0x10] sm:$0xff]
    %v366 = vld [vmem:[#allocation5 + $0x18] sm:$0xff]
    %v367 = vld [vmem:[#allocation5 + $0x20] sm:$0xff]
    %v368 = vld [vmem:[#allocation5 + $0x28] sm:$0xff]
    %v369 = vld [vmem:[#allocation5 + $0x30] sm:$0xff]
    %v370 = vld [vmem:[#allocation5 + $0x38] sm:$0xff]
    %v371 = vld [vmem:[#allocation5 + $0x40] sm:$0xff]
    %v372 = vld [vmem:[#allocation5 + $0x48] sm:$0xff]
    %v373 = vld [vmem:[#allocation5 + $0x50] sm:$0xff]
    %v374 = vld [vmem:[#allocation5 + $0x58] sm:$0xff]
    %v375 = vld [vmem:[#allocation5 + $0x60] sm:$0xff]
    %v376 = vld [vmem:[#allocation5 + $0x68] sm:$0xff]
    %v377 = vld [vmem:[#allocation5 + $0x70] sm:$0xff]
    %v378 = vld [vmem:[#allocation5 + $0x78] sm:$0xff]
    %v395 = vunpack.c.l.b16 %v363
    %v396 = vunpack.c.h.b16 %v363
    %v397 = vunpack.c.l.b16 %v364
    %v398 = vunpack.c.h.b16 %v364
    %v399 = vunpack.c.l.b16 %v365
    %v400 = vunpack.c.h.b16 %v365
    %v401 = vunpack.c.l.b16 %v366
    %v402 = vunpack.c.h.b16 %v366
    %v403 = vunpack.c.l.b16 %v367
    %v404 = vunpack.c.h.b16 %v367
    %v405 = vunpack.c.l.b16 %v368
    %v406 = vunpack.c.h.b16 %v368
    %v407 = vunpack.c.l.b16 %v369
    %v408 = vunpack.c.h.b16 %v369
    %v409 = vunpack.c.l.b16 %v370
    %v410 = vunpack.c.h.b16 %v370
    %v411 = vunpack.c.l.b16 %v371
    %v412 = vunpack.c.h.b16 %v371
    %v413 = vunpack.c.l.b16 %v372
    %v414 = vunpack.c.h.b16 %v372
    %v415 = vunpack.c.l.b16 %v373
    %v416 = vunpack.c.h.b16 %v373
    %v417 = vunpack.c.l.b16 %v374
    %v418 = vunpack.c.h.b16 %v374
    %v419 = vunpack.c.l.b16 %v375
    %v420 = vunpack.c.h.b16 %v375
    %v421 = vunpack.c.l.b16 %v376
    %v422 = vunpack.c.h.b16 %v376
    %v423 = vunpack.c.l.b16 %v377
    %v424 = vunpack.c.h.b16 %v377
    %v425 = vunpack.c.l.b16 %v378
    %v426 = vunpack.c.h.b16 %v378
    %v427 = vpack.c.b16 %v397, %v395
    %v428 = vpack.c.b16 %v398, %v396
    %v429 = vpack.c.b16 %v401, %v399
    %v430 = vpack.c.b16 %v402, %v400
    %v431 = vpack.c.b16 %v405, %v403
    %v432 = vpack.c.b16 %v406, %v404
    %v433 = vpack.c.b16 %v409, %v407
    %v434 = vpack.c.b16 %v410, %v408
    %v435 = vpack.c.b16 %v413, %v411
    %v436 = vpack.c.b16 %v414, %v412
    %v437 = vpack.c.b16 %v417, %v415
    %v438 = vpack.c.b16 %v418, %v416
    %v439 = vpack.c.b16 %v421, %v419
    %v440 = vpack.c.b16 %v422, %v420
    %v441 = vpack.c.b16 %v425, %v423
    %v442 = vpack.c.b16 %v426, %v424
    %459 = vmatprep.subr.bf16.mxu0 %v442
    %460 = vmatpush1.bf16.msra.mxu0 %v441
    %461 = vmatprep.subr.bf16.mxu0 %v440
    %462 = vmatpush1.bf16.msra.mxu0 %v439
    %463 = vmatprep.subr.bf16.mxu0 %v438
    %464 = vmatpush1.bf16.msra.mxu0 %v437
    %465 = vmatprep.subr.bf16.mxu0 %v436
    %466 = vmatpush1.bf16.msra.mxu0 %v435
    %467 = vmatprep.subr.bf16.mxu0 %v434
    %468 = vmatpush1.bf16.msra.mxu0 %v433
    %469 = vmatprep.subr.bf16.mxu0 %v432
    %470 = vmatpush1.bf16.msra.mxu0 %v431
    %471 = vmatprep.subr.bf16.mxu0 %v430
    %472 = vmatpush1.bf16.msra.mxu0 %v429
    %473 = vmatprep.subr.bf16.mxu0 %v428
    %474 = vmatpush1.bf16.msra.mxu0 %v427
    %475 = vmatprep.subr.bf16.mxu0 0
    %476 = vmatpush2.bf16.msra.mxu0 0
    %477 = vmatprep.subr.bf16.mxu0 0
    %478 = vmatpush2.bf16.msra.mxu0 0
    %479 = vmatprep.subr.bf16.mxu0 0
    %480 = vmatpush2.bf16.msra.mxu0 0
    %481 = vmatprep.subr.bf16.mxu0 0
    %482 = vmatpush2.bf16.msra.mxu0 0
    %483 = vmatprep.subr.bf16.mxu0 0
    %484 = vmatpush2.bf16.msra.mxu0 0
    %485 = vmatprep.subr.bf16.mxu0 0
    %486 = vmatpush2.bf16.msra.mxu0 0
    %487 = vmatprep.subr.bf16.mxu0 0
    %488 = vmatpush2.bf16.msra.mxu0 0
    %489 = vmatprep.subr.bf16.mxu0 0
    %490 = vmatpush2.bf16.msra.mxu0 0
    %491 = vmatprep.mubr.bf16.mxu0 0
    %492 = vmatmul.mubr.bf16.gmra.mxu0 %v362
    %v493 = vpop.f32.mrf.mxu0
    %v494 = vadd.f32 0.0, %v493
    %v495 = vpop.f32.mrf.mxu0
    %v496 = vadd.f32 0.0, %v495
    %v497 = vpop.f32.mrf.mxu0
    %v498 = vpop.f32.mrf.mxu0
    %499 = vdwg.mxu0
    %v500 = vld [vmem:[%s5] sm:$0x1]
    %v501 = vmul.f32 %v292, %v292
    %502 = vadd.xlane.f32.xlu0 %v501
    %v503 = vpop.xlane.xlu0 %502
    %v504 = vadd.f32 %v503, 1e-06
    %v505 = vrsqrt.pop %v504
    %v506 = vmul.f32 %v504, %v505
    %vm507 = vcmp.eq.f32.partialorder %v504, inf
    %v508 = vsel %vm507, %v504, %v506
    %vm509 = vcmp.eq.f32.partialorder %v504, 0.0
    %v510 = vand.u32 %v504, 2147483648
    %v511 = vsel %vm509, %v510, %v508
    %v512 = vmax.f32 %v511, 0.0
    %v513 = vmin.f32 %v512, 15.0
    %v514 = vtanh.pop %v513
    %v515 = vrcp.pop %v511
    %v516 = vmul.f32 %v514, %v515
    %v517 = vmul.f32 %v292, %v516
    %v518 = vmul.f32 %v514, %v514
    %v519 = vmul.f32 %v500, %v500
    %vm520 = vcmask 1040384
    %v521 = vsel %vm520, %v519, 0.0
    %522 = vadd.xlane.f32.xlu0 %v521
    %v523 = vpop.xlane.xlu0 %522
    %v525 = vlaneseq
    %v526 = vshrl.u32 %v525, 7
    %v527 = vsub.s32 0, %v526
    %v528 = vrot.slane %v500, %v527
    %v530 = vmul.f32 %v517, %v528
    %531 = vadd.xlane.f32.xlu0 %v530
    %v532 = vpop.xlane.xlu0 %531
    %v533 = vmul.f32 %v532, 2.0
    %v534 = vadd.f32 %v533, 1.0
    %v535 = vlaneseq
    %v536 = vshrl.u32 %v535, 7
    %v537 = vsub.s32 0, %v536
    %v538 = vrot.slane %v523, %v537
    %v539 = vadd.f32 %v534, %v538
    %v540 = vmul.f32 %v539, %v517
    %v541 = vsub.f32 1.0, %v518
    %v542 = vmul.f32 %v541, %v528
    %v543 = vadd.f32 %v540, %v542
    %v544 = vmul.f32 %v518, %v538
    %v545 = vadd.f32 %v534, %v544
    %v546 = vadd.f32 %v545, 1e-06
    %v547 = vrcp.pop %v546
    %v548 = vmul.f32 %v543, %v547
    %v549 = vmul.f32 %v494, %v494
    %550 = vadd.xlane.f32.xlu0 %v549
    %v551 = vpop.xlane.xlu0 %550
    %v552 = vadd.f32 %v551, 1e-06
    %v553 = vrsqrt.pop %v552
    %v554 = vmul.f32 %v552, %v553
    %vm555 = vcmp.eq.f32.partialorder %v552, inf
    %v556 = vsel %vm555, %v552, %v554
    %vm557 = vcmp.eq.f32.partialorder %v552, 0.0
    %v558 = vand.u32 %v552, 2147483648
    %v559 = vsel %vm557, %v558, %v556
    %v560 = vmax.f32 %v559, 0.0
    %v561 = vmin.f32 %v560, 15.0
    %v562 = vtanh.pop %v561
    %v563 = vrcp.pop %v559
    %v564 = vmul.f32 %v562, %v563
    %v565 = vmul.f32 %v494, %v564
    %v566 = vmul.f32 %v562, %v562
    %v567 = vmul.f32 %v565, %v548
    %568 = vadd.xlane.f32.xlu0 %v567
    %v569 = vpop.xlane.xlu0 %568
    %v570 = vmul.f32 %v548, %v548
    %571 = vadd.xlane.f32.xlu0 %v570
    %v572 = vpop.xlane.xlu0 %571
    %v573 = vmul.f32 %v569, 2.0
    %v574 = vadd.f32 %v573, 1.0
    %v575 = vadd.f32 %v574, %v572
    %v576 = vmul.f32 %v575, %v565
    %v577 = vsub.f32 1.0, %v566
    %v578 = vmul.f32 %v577, %v548
    %v579 = vadd.f32 %v576, %v578
    %v580 = vmul.f32 %v566, %v572
    %v581 = vadd.f32 %v574, %v580
    %v582 = vadd.f32 %v581, 1e-06
    %v583 = vrcp.pop %v582
    %v584 = vmul.f32 %v579, %v583
    %v585 = vmul.f32 %v584, %v584
    %586 = vadd.xlane.f32.xlu0 %v585
    %v587 = vpop.xlane.xlu0 %586
    %v588 = vadd.f32 %v587, 1e-06
    %v589 = vrsqrt.pop %v588
    %v590 = vmul.f32 %v588, %v589
    %vm591 = vcmp.eq.f32.partialorder %v588, inf
    %v592 = vsel %vm591, %v588, %v590
    %vm593 = vcmp.eq.f32.partialorder %v588, 0.0
    %v594 = vand.u32 %v588, 2147483648
    %v595 = vsel %vm593, %v594, %v592
    %v596 = vmax.f32 %v595, 0.0
    %v597 = vmin.f32 %v596, 0.99999
    %v598 = vadd.f32 %v597, 1.0
    %v599 = vsub.f32 1.0, %v597
    %v600 = vrcp.pop %v599
    %v601 = vmul.f32 %v598, %v600
    %v602 = vlog2.pop %v601
    %v603 = vmul.f32 %v602, 0.6931472
    %v604 = vmul.f32 %v603, 0.5
    %v605 = vrcp.pop %v595
    %v606 = vmul.f32 %v604, %v605
    %v607 = vmul.f32 %v584, %v606
    %v608 = vxor.u32 %v607, 2147483648
    %v609 = vmul.f32 %v608, 1.442695
    %v610 = vpow.pop %v609
    %v611 = vadd.f32 %v610, 1.0
    %v612 = vrcp.pop %v611
    %v613 = vmul.f32 1.0, %v612
    %v614 = vmul.f32 %v613, %v361
    %v615 = vpack.c.bf16 %v614, %v614
    %v616 = vld [vmem:[#allocation7] sm:$0xf]
    %v617 = vld [vmem:[#allocation7 + $0x4] sm:$0xf]
    %v618 = vld [vmem:[#allocation7 + $0x8] sm:$0xf]
    %v619 = vld [vmem:[#allocation7 + $0xc] sm:$0xf]
    %v620 = vld [vmem:[#allocation7 + $0x10] sm:$0xf]
    %v621 = vld [vmem:[#allocation7 + $0x14] sm:$0xf]
    %v622 = vld [vmem:[#allocation7 + $0x18] sm:$0xf]
    %v623 = vld [vmem:[#allocation7 + $0x1c] sm:$0xf]
    %v624 = vld [vmem:[#allocation7 + $0x20] sm:$0xf]
    %v625 = vld [vmem:[#allocation7 + $0x24] sm:$0xf]
    %v626 = vld [vmem:[#allocation7 + $0x28] sm:$0xf]
    %v627 = vld [vmem:[#allocation7 + $0x2c] sm:$0xf]
    %v628 = vld [vmem:[#allocation7 + $0x30] sm:$0xf]
    %v629 = vld [vmem:[#allocation7 + $0x34] sm:$0xf]
    %v630 = vld [vmem:[#allocation7 + $0x38] sm:$0xf]
    %v631 = vld [vmem:[#allocation7 + $0x3c] sm:$0xf]
    %v648 = vunpack.c.l.b16 %v616
    %v649 = vunpack.c.l.b16 %v617
    %v650 = vunpack.c.l.b16 %v618
    %v651 = vunpack.c.l.b16 %v619
    %v652 = vunpack.c.l.b16 %v620
    %v653 = vunpack.c.l.b16 %v621
    %v654 = vunpack.c.l.b16 %v622
    %v655 = vunpack.c.l.b16 %v623
    %v656 = vunpack.c.l.b16 %v624
    %v657 = vunpack.c.l.b16 %v625
    %v658 = vunpack.c.l.b16 %v626
    %v659 = vunpack.c.l.b16 %v627
    %v660 = vunpack.c.l.b16 %v628
    %v661 = vunpack.c.l.b16 %v629
    %v662 = vunpack.c.l.b16 %v630
    %v663 = vunpack.c.l.b16 %v631
    %v664 = vpack.c.b16 %v649, %v648
    %v665 = vpack.c.b16 %v651, %v650
    %v666 = vpack.c.b16 %v653, %v652
    %v667 = vpack.c.b16 %v655, %v654
    %v668 = vpack.c.b16 %v657, %v656
    %v669 = vpack.c.b16 %v659, %v658
    %v670 = vpack.c.b16 %v661, %v660
    %v671 = vpack.c.b16 %v663, %v662
    %680 = vmatprep.subr.bf16.mxu0 0
    %681 = vmatpush1.bf16.msra.mxu0 %v671
    %682 = vmatprep.subr.bf16.mxu0 0
    %683 = vmatpush1.bf16.msra.mxu0 %v670
    %684 = vmatprep.subr.bf16.mxu0 0
    %685 = vmatpush1.bf16.msra.mxu0 %v669
    %686 = vmatprep.subr.bf16.mxu0 0
    %687 = vmatpush1.bf16.msra.mxu0 %v668
    %688 = vmatprep.subr.bf16.mxu0 0
    %689 = vmatpush1.bf16.msra.mxu0 %v667
    %690 = vmatprep.subr.bf16.mxu0 0
    %691 = vmatpush1.bf16.msra.mxu0 %v666
    %692 = vmatprep.subr.bf16.mxu0 0
    %693 = vmatpush1.bf16.msra.mxu0 %v665
    %694 = vmatprep.subr.bf16.mxu0 0
    %695 = vmatpush1.bf16.msra.mxu0 %v664
    %696 = vmatprep.subr.bf16.mxu0 0
    %697 = vmatpush2.bf16.msra.mxu0 0
    %698 = vmatprep.subr.bf16.mxu0 0
    %699 = vmatpush2.bf16.msra.mxu0 0
    %700 = vmatprep.subr.bf16.mxu0 0
    %701 = vmatpush2.bf16.msra.mxu0 0
    %702 = vmatprep.subr.bf16.mxu0 0
    %703 = vmatpush2.bf16.msra.mxu0 0
    %704 = vmatprep.subr.bf16.mxu0 0
    %705 = vmatpush2.bf16.msra.mxu0 0
    %706 = vmatprep.subr.bf16.mxu0 0
    %707 = vmatpush2.bf16.msra.mxu0 0
    %708 = vmatprep.subr.bf16.mxu0 0
    %709 = vmatpush2.bf16.msra.mxu0 0
    %710 = vmatprep.subr.bf16.mxu0 0
    %711 = vmatpush2.bf16.msra.mxu0 0
    %712 = vmatprep.mubr.bf16.mxu0 0
    %713 = vmatmul.mubr.bf16.gmra.mxu0 %v615
    %v714 = vpop.f32.mrf.mxu0
    %v715 = vadd.f32 0.0, %v714
    %v716 = vpop.f32.mrf.mxu0
    %v717 = vpop.f32.mrf.mxu0
    %v718 = vpop.f32.mrf.mxu0
    %719 = vdwg.mxu0
    %v720 = vmul.f32 %v715, %v715
    %721 = vadd.xlane.f32.xlu0 %v720
    %v722 = vpop.xlane.xlu0 %721
    %v723 = vadd.f32 %v722, 1e-06
    %v724 = vrsqrt.pop %v723
    %v725 = vmul.f32 %v723, %v724
    %vm726 = vcmp.eq.f32.partialorder %v723, inf
    %v727 = vsel %vm726, %v723, %v725
    %vm728 = vcmp.eq.f32.partialorder %v723, 0.0
    %v729 = vand.u32 %v723, 2147483648
    %v730 = vsel %vm728, %v729, %v727
    %v731 = vmax.f32 %v730, 0.0
    %v732 = vmin.f32 %v731, 15.0
    %v733 = vtanh.pop %v732
    %v734 = vrcp.pop %v730
    %v735 = vmul.f32 %v733, %v734
    %v736 = vmul.f32 %v715, %v735
    %v737 = vmul.f32 %v733, %v733
    %v738 = vld [vmem:[%s7] sm:$0x1]
    %v739 = vmul.f32 %v333, %v333
    %740 = vadd.xlane.f32.xlu0 %v739
    %v741 = vpop.xlane.xlu0 %740
    %v742 = vadd.f32 %v741, 1e-06
    %v743 = vrsqrt.pop %v742
    %v744 = vmul.f32 %v742, %v743
    %vm745 = vcmp.eq.f32.partialorder %v742, inf
    %v746 = vsel %vm745, %v742, %v744
    %vm747 = vcmp.eq.f32.partialorder %v742, 0.0
    %v748 = vand.u32 %v742, 2147483648
    %v749 = vsel %vm747, %v748, %v746
    %v750 = vmax.f32 %v749, 0.0
    %v751 = vmin.f32 %v750, 15.0
    %v752 = vtanh.pop %v751
    %v753 = vrcp.pop %v749
    %v754 = vmul.f32 %v752, %v753
    %v755 = vmul.f32 %v333, %v754
    %v756 = vmul.f32 %v752, %v752
    %v757 = vmul.f32 %v738, %v738
    %v758 = vsel %vm520, %v757, 0.0
    %759 = vadd.xlane.f32.xlu0 %v758
    %v760 = vpop.xlane.xlu0 %759
    %v762 = vlaneseq
    %v763 = vshrl.u32 %v762, 7
    %v764 = vsub.s32 0, %v763
    %v765 = vrot.slane %v738, %v764
    %v767 = vmul.f32 %v755, %v765
    %768 = vadd.xlane.f32.xlu0 %v767
    %v769 = vpop.xlane.xlu0 %768
    %v770 = vmul.f32 %v769, 2.0
    %v771 = vadd.f32 %v770, 1.0
    %v772 = vlaneseq
    %v773 = vshrl.u32 %v772, 7
    %v774 = vsub.s32 0, %v773
    %v775 = vrot.slane %v760, %v774
    %v776 = vadd.f32 %v771, %v775
    %v777 = vmul.f32 %v776, %v755
    %v778 = vsub.f32 1.0, %v756
    %v779 = vmul.f32 %v778, %v765
    %v780 = vadd.f32 %v777, %v779
    %v781 = vmul.f32 %v756, %v775
    %v782 = vadd.f32 %v771, %v781
    %v783 = vadd.f32 %v782, 1e-06
    %v784 = vrcp.pop %v783
    %v785 = vmul.f32 %v780, %v784
    %v786 = vmul.f32 %v736, %v785
    %787 = vadd.xlane.f32.xlu0 %v786
    %v788 = vpop.xlane.xlu0 %787
    %v789 = vmul.f32 %v785, %v785
    %790 = vadd.xlane.f32.xlu0 %v789
    %v791 = vpop.xlane.xlu0 %790
    %v792 = vmul.f32 %v788, 2.0
    %v793 = vadd.f32 %v792, 1.0
    %v794 = vadd.f32 %v793, %v791
    %v795 = vmul.f32 %v794, %v736
    %v796 = vsub.f32 1.0, %v737
    %v797 = vmul.f32 %v796, %v785
    %v798 = vadd.f32 %v795, %v797
    %v799 = vmul.f32 %v737, %v791
    %v800 = vadd.f32 %v793, %v799
    %v801 = vadd.f32 %v800, 1e-06
    %v802 = vrcp.pop %v801
    %v803 = vmul.f32 %v798, %v802
    %v804 = vmul.f32 %v803, %v803
    %805 = vadd.xlane.f32.xlu0 %v804
    %v806 = vpop.xlane.xlu0 %805
    %v807 = vadd.f32 %v806, 1e-06
    %v808 = vrsqrt.pop %v807
    %v809 = vmul.f32 %v807, %v808
    %vm810 = vcmp.eq.f32.partialorder %v807, inf
    %v811 = vsel %vm810, %v807, %v809
    %vm812 = vcmp.eq.f32.partialorder %v807, 0.0
    %v813 = vand.u32 %v807, 2147483648
    %v814 = vsel %vm812, %v813, %v811
    %v815 = vmax.f32 %v814, 0.0
    %v816 = vmin.f32 %v815, 0.99999
    %v817 = vadd.f32 %v816, 1.0
    %v818 = vsub.f32 1.0, %v816
    %v819 = vrcp.pop %v818
    %v820 = vmul.f32 %v817, %v819
    %v821 = vlog2.pop %v820
    %v822 = vmul.f32 %v821, 0.6931472
    %v823 = vmul.f32 %v822, 0.5
    %v824 = vrcp.pop %v814
    %v825 = vmul.f32 %v823, %v824
    %v826 = vmul.f32 %v803, %v825
    %v827 = vtanh.pop %v826
    %v828 = vmul.f32 %v827, %v827
    %829 = vadd.xlane.f32.xlu0 %v828
    %v830 = vpop.xlane.xlu0 %829
    %v831 = vadd.f32 %v830, 1e-06
    %v832 = vrsqrt.pop %v831
    %v833 = vmul.f32 %v831, %v832
    %vm834 = vcmp.eq.f32.partialorder %v831, inf
    %v835 = vsel %vm834, %v831, %v833
    %vm836 = vcmp.eq.f32.partialorder %v831, 0.0
    %v837 = vand.u32 %v831, 2147483648
    %v838 = vsel %vm836, %v837, %v835
    %v839 = vmax.f32 %v838, 0.0
    %v840 = vmin.f32 %v839, 15.0
    %v841 = vtanh.pop %v840
    %v842 = vrcp.pop %v838
    %v843 = vmul.f32 %v841, %v842
    %v844 = vmul.f32 %v827, %v843
    %v845 = vmul.f32 %v841, %v841
    %v846 = vld [vmem:[%s6] sm:$0x1]
    %v847 = vmul.f32 %v294, %v294
    %848 = vadd.xlane.f32.xlu0 %v847
    %v849 = vpop.xlane.xlu0 %848
    %v850 = vadd.f32 %v849, 1e-06
    %v851 = vrsqrt.pop %v850
    %v852 = vmul.f32 %v850, %v851
    %vm853 = vcmp.eq.f32.partialorder %v850, inf
    %v854 = vsel %vm853, %v850, %v852
    %vm855 = vcmp.eq.f32.partialorder %v850, 0.0
    %v856 = vand.u32 %v850, 2147483648
    %v857 = vsel %vm855, %v856, %v854
    %v858 = vmax.f32 %v857, 0.0
    %v859 = vmin.f32 %v858, 15.0
    %v860 = vtanh.pop %v859
    %v861 = vrcp.pop %v857
    %v862 = vmul.f32 %v860, %v861
    %v863 = vmul.f32 %v294, %v862
    %v864 = vmul.f32 %v860, %v860
    %v865 = vmul.f32 %v846, %v846
    %v866 = vsel %vm520, %v865, 0.0
    %867 = vadd.xlane.f32.xlu0 %v866
    %v868 = vpop.xlane.xlu0 %867
    %v870 = vlaneseq
    %v871 = vshrl.u32 %v870, 7
    %v872 = vsub.s32 0, %v871
    %v873 = vrot.slane %v846, %v872
    %v875 = vmul.f32 %v863, %v873
    %876 = vadd.xlane.f32.xlu0 %v875
    %v877 = vpop.xlane.xlu0 %876
    %v878 = vmul.f32 %v877, 2.0
    %v879 = vadd.f32 %v878, 1.0
    %v880 = vlaneseq
    %v881 = vshrl.u32 %v880, 7
    %v882 = vsub.s32 0, %v881
    %v883 = vrot.slane %v868, %v882
    %v884 = vadd.f32 %v879, %v883
    %v885 = vmul.f32 %v884, %v863
    %v886 = vsub.f32 1.0, %v864
    %v887 = vmul.f32 %v886, %v873
    %v888 = vadd.f32 %v885, %v887
    %v889 = vmul.f32 %v864, %v883
    %v890 = vadd.f32 %v879, %v889
    %v891 = vadd.f32 %v890, 1e-06
    %v892 = vrcp.pop %v891
    %v893 = vmul.f32 %v888, %v892
    %v894 = vmul.f32 %v496, %v496
    %895 = vadd.xlane.f32.xlu0 %v894
    %v896 = vpop.xlane.xlu0 %895
    %v897 = vadd.f32 %v896, 1e-06
    %v898 = vrsqrt.pop %v897
    %v899 = vmul.f32 %v897, %v898
    %vm900 = vcmp.eq.f32.partialorder %v897, inf
    %v901 = vsel %vm900, %v897, %v899
    %vm902 = vcmp.eq.f32.partialorder %v897, 0.0
    %v903 = vand.u32 %v897, 2147483648
    %v904 = vsel %vm902, %v903, %v901
    %v905 = vmax.f32 %v904, 0.0
    %v906 = vmin.f32 %v905, 15.0
    %v907 = vtanh.pop %v906
    %v908 = vrcp.pop %v904
    %v909 = vmul.f32 %v907, %v908
    %v910 = vmul.f32 %v496, %v909
    %v911 = vmul.f32 %v907, %v907
    %v912 = vmul.f32 %v910, %v893
    %913 = vadd.xlane.f32.xlu0 %v912
    %v914 = vpop.xlane.xlu0 %913
    %v915 = vmul.f32 %v893, %v893
    %916 = vadd.xlane.f32.xlu0 %v915
    %v917 = vpop.xlane.xlu0 %916
    %v918 = vmul.f32 %v914, 2.0
    %v919 = vadd.f32 %v918, 1.0
    %v920 = vadd.f32 %v919, %v917
    %v921 = vmul.f32 %v920, %v910
    %v922 = vsub.f32 1.0, %v911
    %v923 = vmul.f32 %v922, %v893
    %v924 = vadd.f32 %v921, %v923
    %v925 = vmul.f32 %v911, %v917
    %v926 = vadd.f32 %v919, %v925
    %v927 = vadd.f32 %v926, 1e-06
    %v928 = vrcp.pop %v927
    %v929 = vmul.f32 %v924, %v928
    %v930 = vmul.f32 %v929, %v929
    %931 = vadd.xlane.f32.xlu0 %v930
    %v932 = vpop.xlane.xlu0 %931
    %v933 = vadd.f32 %v932, 1e-06
    %v934 = vrsqrt.pop %v933
    %v935 = vmul.f32 %v933, %v934
    %vm936 = vcmp.eq.f32.partialorder %v933, inf
    %v937 = vsel %vm936, %v933, %v935
    %vm938 = vcmp.eq.f32.partialorder %v933, 0.0
    %v939 = vand.u32 %v933, 2147483648
    %v940 = vsel %vm938, %v939, %v937
    %v941 = vmax.f32 %v940, 0.0
    %v942 = vmin.f32 %v941, 0.99999
    %v943 = vadd.f32 %v942, 1.0
    %v944 = vsub.f32 1.0, %v942
    %v945 = vrcp.pop %v944
    %v946 = vmul.f32 %v943, %v945
    %v947 = vlog2.pop %v946
    %v948 = vmul.f32 %v947, 0.6931472
    %v949 = vmul.f32 %v948, 0.5
    %v950 = vrcp.pop %v940
    %v951 = vmul.f32 %v949, %v950
    %v952 = vmul.f32 %v929, %v951
    %v953 = vxor.u32 %v952, 2147483648
    %v954 = vmul.f32 %v953, 1.442695
    %v955 = vpow.pop %v954
    %v956 = vadd.f32 %v955, 1.0
    %v957 = vrcp.pop %v956
    %v958 = vmul.f32 1.0, %v957
    %v959 = vsub.f32 0.0, %v338
    %v960 = vmul.f32 %v959, %v844
    %961 = vadd.xlane.f32.xlu0 %v960
    %v962 = vpop.xlane.xlu0 %961
    %v963 = vmul.f32 %v962, 2.0
    %v964 = vadd.f32 %v963, 1.0
    %v965 = vadd.f32 %v964, %v845
    %v966 = vmul.f32 %v965, %v959
    %v967 = vsub.f32 1.0, %v341
    %v968 = vmul.f32 %v967, %v844
    %v969 = vadd.f32 %v966, %v968
    %v970 = vmul.f32 %v341, %v845
    %v971 = vadd.f32 %v964, %v970
    %v972 = vadd.f32 %v971, 1e-06
    %v973 = vrcp.pop %v972
    %v974 = vmul.f32 %v969, %v973
    %v975 = vmul.f32 %v974, %v974
    %976 = vadd.xlane.f32.xlu0 %v975
    %v977 = vpop.xlane.xlu0 %976
    %v978 = vadd.f32 %v977, 1e-06
    %v979 = vrsqrt.pop %v978
    %v980 = vmul.f32 %v978, %v979
    %vm981 = vcmp.eq.f32.partialorder %v978, inf
    %v982 = vsel %vm981, %v978, %v980
    %vm983 = vcmp.eq.f32.partialorder %v978, 0.0
    %v984 = vand.u32 %v978, 2147483648
    %v985 = vsel %vm983, %v984, %v982
    %v986 = vmax.f32 %v985, 0.0
    %v987 = vmin.f32 %v986, 0.99999
    %v988 = vadd.f32 %v987, 1.0
    %v989 = vsub.f32 1.0, %v987
    %v990 = vrcp.pop %v989
    %v991 = vmul.f32 %v988, %v990
    %v992 = vlog2.pop %v991
    %v993 = vmul.f32 %v992, 0.6931472
    %v994 = vmul.f32 %v993, 0.5
    %v995 = vrcp.pop %v985
    %v996 = vmul.f32 %v994, %v995
    %v997 = vmul.f32 %v974, %v996
    %v998 = vmul.f32 %v958, %v997
    %v999 = vmul.f32 %v998, %v998
    %1000 = vadd.xlane.f32.xlu0 %v999
    %v1001 = vpop.xlane.xlu0 %1000
    %v1002 = vadd.f32 %v1001, 1e-06
    %v1003 = vrsqrt.pop %v1002
    %v1004 = vmul.f32 %v1002, %v1003
    %vm1005 = vcmp.eq.f32.partialorder %v1002, inf
    %v1006 = vsel %vm1005, %v1002, %v1004
    %vm1007 = vcmp.eq.f32.partialorder %v1002, 0.0
    %v1008 = vand.u32 %v1002, 2147483648
    %v1009 = vsel %vm1007, %v1008, %v1006
    %v1010 = vmax.f32 %v1009, 0.0
    %v1011 = vmin.f32 %v1010, 15.0
    %v1012 = vtanh.pop %v1011
    %v1013 = vrcp.pop %v1009
    %v1014 = vmul.f32 %v1012, %v1013
    %v1015 = vmul.f32 %v998, %v1014
    %v1016 = vmul.f32 %v1012, %v1012
    %v1017 = vmul.f32 %v338, %v1015
    %1018 = vadd.xlane.f32.xlu0 %v1017
    %v1019 = vpop.xlane.xlu0 %1018
    %v1020 = vmul.f32 %v1019, 2.0
    %v1021 = vadd.f32 %v1020, 1.0
    %v1022 = vadd.f32 %v1021, %v1016
    %v1023 = vmul.f32 %v1022, %v338
    %v1024 = vmul.f32 %v967, %v1015
    %v1025 = vadd.f32 %v1023, %v1024
    %v1026 = vmul.f32 %v341, %v1016
    %v1027 = vadd.f32 %v1021, %v1026
    %v1028 = vadd.f32 %v1027, 1e-06
    %v1029 = vrcp.pop %v1028
    %v1030 = vmul.f32 %v1025, %v1029
    %1031 = vst [vmem:[#allocation8] sm:$0xff] %v1030
    // Predicated region
    $region46: #{gru_cell.1} parent=1 // pred_check
      _
    $region47: #{gru_cell.1} parent=1 // pred_check_branch
      %1033 = sbr.rel (0) target = $region49
    $region48: #{gru_cell.1} parent=1 // pred_region
      %s1035 = ssub.s32 128, 128
      %1036 = vsyncadd [#allocation4], %s1035
      %s1038 = sshll.u32 [#allocation8], 4
      %s1039 = int_to_ptr.vmem [resolvable:$true] %s1038
      %1041 = dma.vmem_to_hbm [thread:$0]  %s1039, 128, %s8, [#allocation4]
    $region49: #{gru_cell.1} parent=1 // pred_fallthru
      _
    // Predicated region
    $region50: #{gru_cell.1} parent=1 // pred_check
      _
    $region51: #{gru_cell.1} parent=1 // pred_check_branch
      %1043 = sbr.rel (0) target = $region53
    $region52: #{gru_cell.1} parent=1 // pred_region
      %1044 = dma.done [#allocation4], 128
    $region53: #{gru_cell.1} parent=1 // pred_fallthru
      _
    %1045 = vsyncpa [#allocation3], 1
    %1046 = vsyncpa [#allocation6], 1
    %1047 = vsyncpa [#allocation4], 1

</llo_original>
